<compile_context>
chip_gen: v5e
topology: v5e:2x2
jax: 0.10.0
libtpu: 0.0.40
codegen_flags: <defaults>
</compile_context>

<pallas_src>
import functools

import jax
import jax.numpy as jnp
from jax import lax
from jax.experimental import pallas as pl
from jax.experimental.pallas import tpu as pltpu


# Static feature-extractor configuration (never traced).
# (in_channels, out_channels, kernel_size, stride, padding)
CONV_CFG = ((1, 32, 5, 4, 2), (32, 64, 5, 4, 2), (64, 80, 3, 4, 1))
LANE = 128


def _out_len(l, k, s, p):
    return (l + 2 * p - k) // s + 1


def _round_up(x, m):
    return ((x + m - 1) // m) * m


# -----------------------------------------------------------------------------
# Fused kernel (one grid step == one batch element):
#   conv1/2/3 + BN(folded) + ReLU for noisy and enhanced audio,
#   KWS linear head on the enhanced features (lane-dense 128-wide logits),
#   OT cosine cost + Sinkhorn-Knopp + Wasserstein value (per-b scalar row).
# -----------------------------------------------------------------------------
def _fused_sekws_kernel(pn_ref, pe_ref,
                        w1_ref, b1_ref, w2_ref, b2_ref, w3_ref, b3_ref,
                        wk_ref, bk_ref,
                        logits_ref, ot_ref,
                        h1pad_ref, h2pad_ref,
                        *, l1, l2, l3, k2, k3, p2, p3, s2, s3,
                        epsilon, max_iter):
    f32 = jnp.float32

    def feature_stack(patches):                        # patches: (k1, l1) time-last
        # conv1 + bn1 + relu -> time-major (l1, 32); TN contraction over k1.
        h1 = lax.dot_general(patches, w1_ref[...], (((0,), (0,)), ((), ())),
                             preferred_element_type=f32)
        h1 = jnp.maximum(h1 + b1_ref[...], 0.0)

        # conv2 + bn2 + relu: stage zero-padded h1 in VMEM scratch, gather the
        # stride-4 taps with static sublane-strided slices, one merged matmul.
        c1 = h1.shape[1]
        h1pad_ref[0:p2, :] = jnp.zeros((p2, c1), f32)
        h1pad_ref[p2:p2 + l1, :] = h1
        tail1 = h1pad_ref.shape[0] - (p2 + l1)
        if tail1 > 0:
            h1pad_ref[p2 + l1:, :] = jnp.zeros((tail1, c1), f32)
        sel2 = jnp.concatenate(
            [h1pad_ref[pl.ds(t, l2, stride=s2), :] for t in range(k2)], axis=-1)
        h2 = jnp.maximum(
            jnp.dot(sel2, w2_ref[...], preferred_element_type=f32) + b2_ref[...],
            0.0)                                                        # (l2, 64)

        # conv3 + bn3 + relu
        c2 = h2.shape[1]
        h2pad_ref[0:p3, :] = jnp.zeros((p3, c2), f32)
        h2pad_ref[p3:p3 + l2, :] = h2
        tail2 = h2pad_ref.shape[0] - (p3 + l2)
        if tail2 > 0:
            h2pad_ref[p3 + l2:, :] = jnp.zeros((tail2, c2), f32)
        sel3 = jnp.concatenate(
            [h2pad_ref[pl.ds(t, l3, stride=s3), :] for t in range(k3)], axis=-1)
        h3 = jnp.maximum(
            jnp.dot(sel3, w3_ref[...], preferred_element_type=f32) + b3_ref[...],
            0.0)                                                        # (l3, 80)
        return h3

    feats_n = feature_stack(pn_ref[0])
    feats_e = feature_stack(pe_ref[0])

    # KWS head, lane-dense 128-wide logits (real classes in the first columns;
    # the padded weight columns are zero so the extra logits are exactly 0).
    logits_ref[0] = (jnp.dot(feats_e, wk_ref[...], preferred_element_type=f32)
                     + bk_ref[...])

    # --- OT Wasserstein value (reference formulas, exact f32) ----------------
    def l2norm(z):   # F.normalize(p=2, dim=-1, eps=1e-12)
        return z * lax.rsqrt(jnp.maximum(jnp.sum(z * z, axis=-1, keepdims=True),
                                         1e-24))

    xn, yn = l2norm(feats_n), l2norm(feats_e)
    sim = lax.dot_general(xn, yn, (((1,), (1,)), ((), ())),
                          preferred_element_type=f32)                  # (l3, l3)
    cost = 1.0 - sim
    kmat = jnp.exp(cost * (-1.0 / epsilon))

    u = jnp.ones((l3, 1), f32)
    v = jnp.ones((1, l3), f32)
    for _ in range(max_iter):                 # static unroll (max_iter = 3)
        u = 1.0 / jnp.sum(kmat * v, axis=1, keepdims=True)   # 1 / (K @ v)
        v = 1.0 / jnp.sum(kmat * u, axis=0, keepdims=True)   # 1 / (K^T @ u)

    # transport_plan = einsum('ti,i,j->tj', K, u, v) == (K @ u) outer v
    ku = jnp.dot(kmat, u, preferred_element_type=f32)                  # (l3, 1)
    plan = ku * v                                                      # (l3, l3)
    w_loss = jnp.sum(plan * cost) - jnp.sum(plan * jnp.log(plan + 1e-9))
    ot_ref[0] = jnp.full((1, LANE), w_loss, f32)


# -----------------------------------------------------------------------------
# Host-side wrapper
# -----------------------------------------------------------------------------
def _conv1_patches(audio, k, stride, pad):
    """(N, 1, L) -> (N, k, L1) time-last im2col patches (lane-dense time axis)."""
    _, _, length = audio.shape
    l1 = _out_len(length, k, stride, pad)
    xp = jnp.pad(audio[:, 0, :].astype(jnp.float32), ((0, 0), (pad, pad)))
    idx = stride * jnp.arange(l1)[None, :] + jnp.arange(k)[:, None]     # (k, l1)
    return xp[:, idx], l1


def fused_feature_ot_kws(params, noisy_audio, enhanced_audio,
                         epsilon=10.0, max_iter=3):
    """One pallas_call: features (noisy+enhanced), KWS logits, per-b OT value."""
    b = noisy_audio.shape[0]
    (c1i, c1o, k1, s1, p1), (c2i, c2o, k2, s2, p2), (c3i, c3o, k3, s3, p3) = CONV_CFG

    pn, l1 = _conv1_patches(noisy_audio, k1, s1, p1)
    pe, _ = _conv1_patches(enhanced_audio, k1, s1, p1)
    l2 = _out_len(l1, k2, s2, p2)
    l3 = _out_len(l2, k3, s3, p3)

    # Scratch rows: left pad + activation rows, and enough for the last tap read.
    h1_rows = _round_up(max(p2 + l1, (k2 - 1) + s2 * (l2 - 1) + 1), 8)
    h2_rows = _round_up(max(p3 + l2, (k3 - 1) + s3 * (l3 - 1) + 1), 8)

    num_classes = params["w_kws"].shape[1]
    wk_pad = jnp.zeros((c3o, LANE), jnp.float32).at[:, :num_classes].set(
        params["w_kws"])
    bk_pad = jnp.zeros((1, LANE), jnp.float32).at[0, :num_classes].set(
        params["b_kws"])

    kernel = functools.partial(
        _fused_sekws_kernel, l1=l1, l2=l2, l3=l3, k2=k2, k3=k3,
        p2=p2, p3=p3, s2=s2, s3=s3,
        epsilon=float(epsilon), max_iter=int(max_iter))

    # Advisory cost so XLA can schedule around the custom call.
    macs = l1 * k1 * c1o + l2 * k2 * c2i * c2o + l3 * k3 * c3i * c3o
    per_b_flops = (2 * 2 * macs            # two feature passes
                   + 2 * l3 * c3o * LANE   # kws head
                   + 2 * l3 * c3o * l3     # cosine sim
                   + 20 * l3 * l3)         # sinkhorn / entropy elementwise
    weight_bytes = 4 * (k1 * c1o + c1o + k2 * c2i * c2o + c2o
                        + k3 * c3i * c3o + c3o + c3o * LANE + LANE)
    cost = pl.CostEstimate(
        flops=int(b * per_b_flops),
        transcendentals=int(b * (2 * l3 * l3 + 2 * l3)),
        bytes_accessed=int(4 * (pn.size + pe.size) + weight_bytes
                           + 4 * b * (l3 * LANE + LANE)))

    logits_pad, ot_per_b = pl.pallas_call(
        kernel,
        out_shape=(jax.ShapeDtypeStruct((b, l3, LANE), jnp.float32),
                   jax.ShapeDtypeStruct((b, 1, LANE), jnp.float32)),
        grid=(b,),
        in_specs=[
            pl.BlockSpec((1, k1, l1), lambda i: (i, 0, 0)),      # noisy patches
            pl.BlockSpec((1, k1, l1), lambda i: (i, 0, 0)),      # enhanced patches
            pl.BlockSpec((k1, c1o), lambda i: (0, 0)),           # w1 (resident)
            pl.BlockSpec((1, c1o), lambda i: (0, 0)),
            pl.BlockSpec((k2 * c2i, c2o), lambda i: (0, 0)),     # w2 merged (160,64)
            pl.BlockSpec((1, c2o), lambda i: (0, 0)),
            pl.BlockSpec((k3 * c3i, c3o), lambda i: (0, 0)),     # w3 merged (192,80)
            pl.BlockSpec((1, c3o), lambda i: (0, 0)),
            pl.BlockSpec((c3o, LANE), lambda i: (0, 0)),         # kws weight (padded)
            pl.BlockSpec((1, LANE), lambda i: (0, 0)),
        ],
        out_specs=(pl.BlockSpec((1, l3, LANE), lambda i: (i, 0, 0)),
                   pl.BlockSpec((1, 1, LANE), lambda i: (i, 0, 0))),
        scratch_shapes=[pltpu.VMEM((h1_rows, c1o), jnp.float32),
                        pltpu.VMEM((h2_rows, c2o), jnp.float32)],
        compiler_params=pltpu.CompilerParams(
            dimension_semantics=("parallel",),
            vmem_limit_bytes=32 * 1024 * 1024),
        cost_estimate=cost,
    )(pn, pe,
      params["w1"], params["b1"].reshape(1, -1),
      params["w2m"], params["b2"].reshape(1, -1),
      params["w3m"], params["b3"].reshape(1, -1),
      wk_pad, bk_pad)

    logits = logits_pad[:, :, :num_classes]
    ot_loss = jnp.log1p(jnp.mean(ot_per_b[:, 0, 0]))
    return logits, ot_loss


# -----------------------------------------------------------------------------
# Parameters (inference-mode BatchNorm folded into the conv weights) + forward.
# -----------------------------------------------------------------------------
def fold_conv_bn(w, b, gamma, beta, mean, var, eps=1e-5):
    scale = gamma / jnp.sqrt(var + eps)
    return w * scale[:, None, None], (b - mean) * scale + beta


def init_params(key, num_classes=12):
    ks = jax.random.split(key, 13)

    def conv_init(ka, kb, c_out, c_in, ksz):
        bound = 1.0 / (c_in * ksz) ** 0.5
        w = jax.random.uniform(ka, (c_out, c_in, ksz), jnp.float32, -bound, bound)
        bias = jax.random.uniform(kb, (c_out,), jnp.float32, -bound, bound)
        return w, bias

    def bn_init(ka, kb, c):
        gamma = 1.0 + 0.05 * jax.random.normal(ka, (c,), jnp.float32)
        beta = 0.01 * jax.random.normal(kb, (c,), jnp.float32)
        return gamma, beta, jnp.zeros((c,), jnp.float32), jnp.ones((c,), jnp.float32)

    (c1i, c1o, k1, _, _), (c2i, c2o, k2, _, _), (c3i, c3o, k3, _, _) = CONV_CFG
    w1, b1 = conv_init(ks[0], ks[1], c1o, c1i, k1)
    w2, b2 = conv_init(ks[2], ks[3], c2o, c2i, k2)
    w3, b3 = conv_init(ks[4], ks[5], c3o, c3i, k3)
    # TODO(synk): BatchNorm is folded with running stats (eval mode); train-mode
    # batch statistics are not modeled.
    w1f, b1f = fold_conv_bn(w1, b1, *bn_init(ks[6], ks[7], c1o))
    w2f, b2f = fold_conv_bn(w2, b2, *bn_init(ks[8], ks[9], c2o))
    w3f, b3f = fold_conv_bn(w3, b3, *bn_init(ks[10], ks[11], c3o))

    return {
        # kernel-ready layouts
        "w1": jnp.transpose(w1f[:, 0, :], (1, 0)),                     # (k1, 32)
        "b1": b1f,
        "w2m": jnp.transpose(w2f, (2, 1, 0)).reshape(k2 * c2i, c2o),   # (160, 64)
        "b2": b2f,
        "w3m": jnp.transpose(w3f, (2, 1, 0)).reshape(k3 * c3i, c3o),   # (192, 80)
        "b3": b3f,
        "w_kws": 0.1 * jax.random.normal(ks[12], (c3o, num_classes), jnp.float32),
        "b_kws": jnp.zeros((num_classes,), jnp.float32),
        "se_gain": jnp.asarray(0.9, jnp.float32),
    }


def sekws_forward(params, noisy_audio, clean_audio, target):
    # TODO(synk): init_se_model is unspecified; synthetic SE model = learned scalar gain.
    enhanced_audio = params["se_gain"] * noisy_audio

    # Fused feature extractor + KWS head + OT Wasserstein loss (one pallas_call).
    logits, ot_loss = fused_feature_ot_kws(params, noisy_audio, enhanced_audio,
                                           epsilon=10.0, max_iter=3)

    # _calc_loss_:
    se_loss = jnp.mean((enhanced_audio - clean_audio) ** 2)
    # TODO(synk): criterion('max_pooling', ...) is unspecified; max-pool over time + CE.
    pooled = jnp.max(logits, axis=1)                                   # (B, C)
    logp = jax.nn.log_softmax(pooled, axis=-1)
    kws_loss = -jnp.mean(jnp.take_along_axis(logp, target[:, None], axis=-1))

    alpha = 0.7
    loss = (1.0 - alpha) * se_loss + alpha * kws_loss
    loss = 0.3 * ot_loss + 0.7 * loss
    return loss, logits, se_loss, kws_loss, ot_loss


if __name__ == "__main__":
    key = jax.random.PRNGKey(0)
    k_noisy, k_clean, k_tgt, k_params = jax.random.split(key, 4)

    B, L = 2, 1024           # audio length 1024 -> 256 -> 64 -> 16 feature steps
    num_classes = 12

    noisy_audio = jax.random.normal(k_noisy, (B, 1, L), jnp.float32)
    clean_audio = jax.random.normal(k_clean, (B, 1, L), jnp.float32)
    target = jax.random.randint(k_tgt, (B,), 0, num_classes)

    params = init_params(k_params, num_classes=num_classes)

    fwd = jax.jit(sekws_forward)
    loss, logits, se_loss, kws_loss, ot_loss = fwd(
        params, noisy_audio, clean_audio, target)
    jax.block_until_ready((loss, logits, se_loss, kws_loss, ot_loss))

    print("KERNEL_OK")
</pallas_src>

<mosaic_0001>
module attributes {stable_mosaic.version = 11 : i64} {
  func.func @_fused_sekws_kernel(%arg0: i32, %arg1: memref<1x5x256xf32, #tpu.memory_space<vmem>>, %arg2: memref<1x5x256xf32, #tpu.memory_space<vmem>>, %arg3: memref<5x32xf32, #tpu.memory_space<vmem>>, %arg4: memref<1x32xf32, #tpu.memory_space<vmem>>, %arg5: memref<160x64xf32, #tpu.memory_space<vmem>>, %arg6: memref<1x64xf32, #tpu.memory_space<vmem>>, %arg7: memref<192x80xf32, #tpu.memory_space<vmem>>, %arg8: memref<1x80xf32, #tpu.memory_space<vmem>>, %arg9: memref<80x128xf32, #tpu.memory_space<vmem>>, %arg10: memref<1x128xf32, #tpu.memory_space<vmem>>, %arg11: memref<1x16x128xf32, #tpu.memory_space<vmem>>, %arg12: memref<1x1x128xf32, #tpu.memory_space<vmem>>, %arg13: memref<264x32xf32, #tpu.memory_space<vmem>>, %arg14: memref<72x64xf32, #tpu.memory_space<vmem>>) attributes {dimension_semantics = [#tpu.dimension_semantics<parallel>], iteration_bounds = array<i64: 2>, scalar_prefetch = 0 : i64, scratch_operands = 2 : i64, tpu.core_type = #tpu.core_type<tc>, window_params = [{transform_indices = @transform_0, window_bounds = array<i64: 1, 5, 256>}, {transform_indices = @transform_1, window_bounds = array<i64: 1, 5, 256>}, {pipeline_mode = #tpu.pipeline_mode<synchronous>, transform_indices = @transform_2, window_bounds = array<i64: 5, 32>}, {pipeline_mode = #tpu.pipeline_mode<synchronous>, transform_indices = @transform_3, window_bounds = array<i64: 1, 32>}, {pipeline_mode = #tpu.pipeline_mode<synchronous>, transform_indices = @transform_4, window_bounds = array<i64: 160, 64>}, {pipeline_mode = #tpu.pipeline_mode<synchronous>, transform_indices = @transform_5, window_bounds = array<i64: 1, 64>}, {pipeline_mode = #tpu.pipeline_mode<synchronous>, transform_indices = @transform_6, window_bounds = array<i64: 192, 80>}, {pipeline_mode = #tpu.pipeline_mode<synchronous>, transform_indices = @transform_7, window_bounds = array<i64: 1, 80>}, {pipeline_mode = #tpu.pipeline_mode<synchronous>, transform_indices = @transform_8, window_bounds = array<i64: 80, 128>}, {pipeline_mode = #tpu.pipeline_mode<synchronous>, transform_indices = @transform_9, window_bounds = array<i64: 1, 128>}, {transform_indices = @transform_10, window_bounds = array<i64: 1, 16, 128>}, {transform_indices = @transform_11, window_bounds = array<i64: 1, 1, 128>}]} {
    %c0 = arith.constant 0 : index
    %c0_0 = arith.constant 0 : index
    %c0_1 = arith.constant 0 : index
    %0 = vector.load %arg1[%c0, %c0_0, %c0_1] : memref<1x5x256xf32, #tpu.memory_space<vmem>>, vector<1x5x256xf32>
    %1 = vector.shape_cast %0 : vector<1x5x256xf32> to vector<5x256xf32>
    %c0_2 = arith.constant 0 : index
    %c0_3 = arith.constant 0 : index
    %2 = vector.load %arg3[%c0_2, %c0_3] : memref<5x32xf32, #tpu.memory_space<vmem>>, vector<5x32xf32>
    %cst = arith.constant dense<0.000000e+00> : vector<256x32xf32>
    %3 = tpu.matmul %1, %2, %cst {dimension_numbers = #tpu.dot_dimension_numbers<[0], [0], [1], [1], [0, 1, 1, 1], [], []>} : vector<5x256xf32>, vector<5x32xf32>, vector<256x32xf32> -> vector<256x32xf32>
    %c0_4 = arith.constant 0 : index
    %c0_5 = arith.constant 0 : index
    %4 = vector.load %arg4[%c0_4, %c0_5] : memref<1x32xf32, #tpu.memory_space<vmem>>, vector<1x32xf32>
    %5 = vector.broadcast %4 : vector<1x32xf32> to vector<256x32xf32>
    %6 = arith.addf %3, %5 : vector<256x32xf32>
    %cst_6 = arith.constant 0.000000e+00 : f32
    %7 = vector.broadcast %cst_6 : f32 to vector<256x32xf32>
    %8 = arith.maximumf %6, %7 : vector<256x32xf32>
    %cst_7 = arith.constant 0.000000e+00 : f32
    %9 = vector.broadcast %cst_7 : f32 to vector<2x32xf32>
    %c0_8 = arith.constant 0 : index
    %c0_9 = arith.constant 0 : index
    %10 = vector.load %arg13[%c0_8, %c0_9] : memref<264x32xf32, #tpu.memory_space<vmem>>, vector<2x32xf32>
    tpu.vector_store %arg13[%c0_8, %c0_9], %9 {strides = array<i32>} : memref<264x32xf32, #tpu.memory_space<vmem>>, vector<2x32xf32>,
    %c2 = arith.constant 2 : index
    %c0_10 = arith.constant 0 : index
    %11 = vector.load %arg13[%c2, %c0_10] : memref<264x32xf32, #tpu.memory_space<vmem>>, vector<256x32xf32>
    tpu.vector_store %arg13[%c2, %c0_10], %8 {strides = array<i32>} : memref<264x32xf32, #tpu.memory_space<vmem>>, vector<256x32xf32>,
    %cst_11 = arith.constant 0.000000e+00 : f32
    %12 = vector.broadcast %cst_11 : f32 to vector<6x32xf32>
    %c258 = arith.constant 258 : index
    %c0_12 = arith.constant 0 : index
    %13 = vector.load %arg13[%c258, %c0_12] : memref<264x32xf32, #tpu.memory_space<vmem>>, vector<6x32xf32>
    tpu.vector_store %arg13[%c258, %c0_12], %12 {strides = array<i32>} : memref<264x32xf32, #tpu.memory_space<vmem>>, vector<6x32xf32>,
    %c0_13 = arith.constant 0 : index
    %c0_14 = arith.constant 0 : index
    %14 = tpu.strided_load %arg13[%c0_13, %c0_14] {strides = array<i32: 4, 1>} : memref<264x32xf32, #tpu.memory_space<vmem>>, vector<64x32xf32>
    %c1 = arith.constant 1 : index
    %c0_15 = arith.constant 0 : index
    %15 = tpu.strided_load %arg13[%c1, %c0_15] {strides = array<i32: 4, 1>} : memref<264x32xf32, #tpu.memory_space<vmem>>, vector<64x32xf32>
    %c2_16 = arith.constant 2 : index
    %c0_17 = arith.constant 0 : index
    %16 = tpu.strided_load %arg13[%c2_16, %c0_17] {strides = array<i32: 4, 1>} : memref<264x32xf32, #tpu.memory_space<vmem>>, vector<64x32xf32>
    %c3 = arith.constant 3 : index
    %c0_18 = arith.constant 0 : index
    %17 = tpu.strided_load %arg13[%c3, %c0_18] {strides = array<i32: 4, 1>} : memref<264x32xf32, #tpu.memory_space<vmem>>, vector<64x32xf32>
    %c4 = arith.constant 4 : index
    %c0_19 = arith.constant 0 : index
    %18 = tpu.strided_load %arg13[%c4, %c0_19] {strides = array<i32: 4, 1>} : memref<264x32xf32, #tpu.memory_space<vmem>>, vector<64x32xf32>
    %19 = tpu.concatenate %14, %15, %16, %17, %18 in 1 : vector<64x32xf32>, vector<64x32xf32>, vector<64x32xf32>, vector<64x32xf32>, vector<64x32xf32> -> vector<64x160xf32>
    %c0_20 = arith.constant 0 : index
    %c0_21 = arith.constant 0 : index
    %20 = vector.load %arg5[%c0_20, %c0_21] : memref<160x64xf32, #tpu.memory_space<vmem>>, vector<160x64xf32>
    %cst_22 = arith.constant dense<0.000000e+00> : vector<64x64xf32>
    %21 = tpu.matmul %19, %20, %cst_22 {dimension_numbers = #tpu.dot_dimension_numbers<[1], [0], [0], [1], [0, 0, 1, 1], [], []>} : vector<64x160xf32>, vector<160x64xf32>, vector<64x64xf32> -> vector<64x64xf32>
    %c0_23 = arith.constant 0 : index
    %c0_24 = arith.constant 0 : index
    %22 = vector.load %arg6[%c0_23, %c0_24] : memref<1x64xf32, #tpu.memory_space<vmem>>, vector<1x64xf32>
    %23 = vector.broadcast %22 : vector<1x64xf32> to vector<64x64xf32>
    %24 = arith.addf %21, %23 : vector<64x64xf32>
    %cst_25 = arith.constant 0.000000e+00 : f32
    %25 = vector.broadcast %cst_25 : f32 to vector<64x64xf32>
    %26 = arith.maximumf %24, %25 : vector<64x64xf32>
    %cst_26 = arith.constant 0.000000e+00 : f32
    %27 = vector.broadcast %cst_26 : f32 to vector<1x64xf32>
    %c0_27 = arith.constant 0 : index
    %c0_28 = arith.constant 0 : index
    %28 = vector.load %arg14[%c0_27, %c0_28] : memref<72x64xf32, #tpu.memory_space<vmem>>, vector<1x64xf32>
    tpu.vector_store %arg14[%c0_27, %c0_28], %27 {strides = array<i32>} : memref<72x64xf32, #tpu.memory_space<vmem>>, vector<1x64xf32>,
    %c1_29 = arith.constant 1 : index
    %c0_30 = arith.constant 0 : index
    %29 = vector.load %arg14[%c1_29, %c0_30] : memref<72x64xf32, #tpu.memory_space<vmem>>, vector<64x64xf32>
    tpu.vector_store %arg14[%c1_29, %c0_30], %26 {strides = array<i32>} : memref<72x64xf32, #tpu.memory_space<vmem>>, vector<64x64xf32>,
    %cst_31 = arith.constant 0.000000e+00 : f32
    %30 = vector.broadcast %cst_31 : f32 to vector<7x64xf32>
    %c65 = arith.constant 65 : index
    %c0_32 = arith.constant 0 : index
    %31 = vector.load %arg14[%c65, %c0_32] : memref<72x64xf32, #tpu.memory_space<vmem>>, vector<7x64xf32>
    tpu.vector_store %arg14[%c65, %c0_32], %30 {strides = array<i32>} : memref<72x64xf32, #tpu.memory_space<vmem>>, vector<7x64xf32>,
    %c0_33 = arith.constant 0 : index
    %c0_34 = arith.constant 0 : index
    %32 = tpu.strided_load %arg14[%c0_33, %c0_34] {strides = array<i32: 4, 1>} : memref<72x64xf32, #tpu.memory_space<vmem>>, vector<16x64xf32>
    %c1_35 = arith.constant 1 : index
    %c0_36 = arith.constant 0 : index
    %33 = tpu.strided_load %arg14[%c1_35, %c0_36] {strides = array<i32: 4, 1>} : memref<72x64xf32, #tpu.memory_space<vmem>>, vector<16x64xf32>
    %c2_37 = arith.constant 2 : index
    %c0_38 = arith.constant 0 : index
    %34 = tpu.strided_load %arg14[%c2_37, %c0_38] {strides = array<i32: 4, 1>} : memref<72x64xf32, #tpu.memory_space<vmem>>, vector<16x64xf32>
    %35 = tpu.concatenate %32, %33, %34 in 1 : vector<16x64xf32>, vector<16x64xf32>, vector<16x64xf32> -> vector<16x192xf32>
    %c0_39 = arith.constant 0 : index
    %c0_40 = arith.constant 0 : index
    %36 = vector.load %arg7[%c0_39, %c0_40] : memref<192x80xf32, #tpu.memory_space<vmem>>, vector<192x80xf32>
    %cst_41 = arith.constant dense<0.000000e+00> : vector<16x80xf32>
    %37 = tpu.matmul %35, %36, %cst_41 {dimension_numbers = #tpu.dot_dimension_numbers<[1], [0], [0], [1], [0, 0, 1, 1], [], []>} : vector<16x192xf32>, vector<192x80xf32>, vector<16x80xf32> -> vector<16x80xf32>
    %c0_42 = arith.constant 0 : index
    %c0_43 = arith.constant 0 : index
    %38 = vector.load %arg8[%c0_42, %c0_43] : memref<1x80xf32, #tpu.memory_space<vmem>>, vector<1x80xf32>
    %39 = vector.broadcast %38 : vector<1x80xf32> to vector<16x80xf32>
    %40 = arith.addf %37, %39 : vector<16x80xf32>
    %cst_44 = arith.constant 0.000000e+00 : f32
    %41 = vector.broadcast %cst_44 : f32 to vector<16x80xf32>
    %42 = arith.maximumf %40, %41 : vector<16x80xf32>
    %c0_45 = arith.constant 0 : index
    %c0_46 = arith.constant 0 : index
    %c0_47 = arith.constant 0 : index
    %43 = vector.load %arg2[%c0_45, %c0_46, %c0_47] : memref<1x5x256xf32, #tpu.memory_space<vmem>>, vector<1x5x256xf32>
    %44 = vector.shape_cast %43 : vector<1x5x256xf32> to vector<5x256xf32>
    %c0_48 = arith.constant 0 : index
    %c0_49 = arith.constant 0 : index
    %45 = vector.load %arg3[%c0_48, %c0_49] : memref<5x32xf32, #tpu.memory_space<vmem>>, vector<5x32xf32>
    %cst_50 = arith.constant dense<0.000000e+00> : vector<256x32xf32>
    %46 = tpu.matmul %44, %45, %cst_50 {dimension_numbers = #tpu.dot_dimension_numbers<[0], [0], [1], [1], [0, 1, 1, 1], [], []>} : vector<5x256xf32>, vector<5x32xf32>, vector<256x32xf32> -> vector<256x32xf32>
    %c0_51 = arith.constant 0 : index
    %c0_52 = arith.constant 0 : index
    %47 = vector.load %arg4[%c0_51, %c0_52] : memref<1x32xf32, #tpu.memory_space<vmem>>, vector<1x32xf32>
    %48 = vector.broadcast %47 : vector<1x32xf32> to vector<256x32xf32>
    %49 = arith.addf %46, %48 : vector<256x32xf32>
    %cst_53 = arith.constant 0.000000e+00 : f32
    %50 = vector.broadcast %cst_53 : f32 to vector<256x32xf32>
    %51 = arith.maximumf %49, %50 : vector<256x32xf32>
    %cst_54 = arith.constant 0.000000e+00 : f32
    %52 = vector.broadcast %cst_54 : f32 to vector<2x32xf32>
    %c0_55 = arith.constant 0 : index
    %c0_56 = arith.constant 0 : index
    %53 = vector.load %arg13[%c0_55, %c0_56] : memref<264x32xf32, #tpu.memory_space<vmem>>, vector<2x32xf32>
    tpu.vector_store %arg13[%c0_55, %c0_56], %52 {strides = array<i32>} : memref<264x32xf32, #tpu.memory_space<vmem>>, vector<2x32xf32>,
    %c2_57 = arith.constant 2 : index
    %c0_58 = arith.constant 0 : index
    %54 = vector.load %arg13[%c2_57, %c0_58] : memref<264x32xf32, #tpu.memory_space<vmem>>, vector<256x32xf32>
    tpu.vector_store %arg13[%c2_57, %c0_58], %51 {strides = array<i32>} : memref<264x32xf32, #tpu.memory_space<vmem>>, vector<256x32xf32>,
    %cst_59 = arith.constant 0.000000e+00 : f32
    %55 = vector.broadcast %cst_59 : f32 to vector<6x32xf32>
    %c258_60 = arith.constant 258 : index
    %c0_61 = arith.constant 0 : index
    %56 = vector.load %arg13[%c258_60, %c0_61] : memref<264x32xf32, #tpu.memory_space<vmem>>, vector<6x32xf32>
    tpu.vector_store %arg13[%c258_60, %c0_61], %55 {strides = array<i32>} : memref<264x32xf32, #tpu.memory_space<vmem>>, vector<6x32xf32>,
    %c0_62 = arith.constant 0 : index
    %c0_63 = arith.constant 0 : index
    %57 = tpu.strided_load %arg13[%c0_62, %c0_63] {strides = array<i32: 4, 1>} : memref<264x32xf32, #tpu.memory_space<vmem>>, vector<64x32xf32>
    %c1_64 = arith.constant 1 : index
    %c0_65 = arith.constant 0 : index
    %58 = tpu.strided_load %arg13[%c1_64, %c0_65] {strides = array<i32: 4, 1>} : memref<264x32xf32, #tpu.memory_space<vmem>>, vector<64x32xf32>
    %c2_66 = arith.constant 2 : index
    %c0_67 = arith.constant 0 : index
    %59 = tpu.strided_load %arg13[%c2_66, %c0_67] {strides = array<i32: 4, 1>} : memref<264x32xf32, #tpu.memory_space<vmem>>, vector<64x32xf32>
    %c3_68 = arith.constant 3 : index
    %c0_69 = arith.constant 0 : index
    %60 = tpu.strided_load %arg13[%c3_68, %c0_69] {strides = array<i32: 4, 1>} : memref<264x32xf32, #tpu.memory_space<vmem>>, vector<64x32xf32>
    %c4_70 = arith.constant 4 : index
    %c0_71 = arith.constant 0 : index
    %61 = tpu.strided_load %arg13[%c4_70, %c0_71] {strides = array<i32: 4, 1>} : memref<264x32xf32, #tpu.memory_space<vmem>>, vector<64x32xf32>
    %62 = tpu.concatenate %57, %58, %59, %60, %61 in 1 : vector<64x32xf32>, vector<64x32xf32>, vector<64x32xf32>, vector<64x32xf32>, vector<64x32xf32> -> vector<64x160xf32>
    %c0_72 = arith.constant 0 : index
    %c0_73 = arith.constant 0 : index
    %63 = vector.load %arg5[%c0_72, %c0_73] : memref<160x64xf32, #tpu.memory_space<vmem>>, vector<160x64xf32>
    %cst_74 = arith.constant dense<0.000000e+00> : vector<64x64xf32>
    %64 = tpu.matmul %62, %63, %cst_74 {dimension_numbers = #tpu.dot_dimension_numbers<[1], [0], [0], [1], [0, 0, 1, 1], [], []>} : vector<64x160xf32>, vector<160x64xf32>, vector<64x64xf32> -> vector<64x64xf32>
    %c0_75 = arith.constant 0 : index
    %c0_76 = arith.constant 0 : index
    %65 = vector.load %arg6[%c0_75, %c0_76] : memref<1x64xf32, #tpu.memory_space<vmem>>, vector<1x64xf32>
    %66 = vector.broadcast %65 : vector<1x64xf32> to vector<64x64xf32>
    %67 = arith.addf %64, %66 : vector<64x64xf32>
    %cst_77 = arith.constant 0.000000e+00 : f32
    %68 = vector.broadcast %cst_77 : f32 to vector<64x64xf32>
    %69 = arith.maximumf %67, %68 : vector<64x64xf32>
    %cst_78 = arith.constant 0.000000e+00 : f32
    %70 = vector.broadcast %cst_78 : f32 to vector<1x64xf32>
    %c0_79 = arith.constant 0 : index
    %c0_80 = arith.constant 0 : index
    %71 = vector.load %arg14[%c0_79, %c0_80] : memref<72x64xf32, #tpu.memory_space<vmem>>, vector<1x64xf32>
    tpu.vector_store %arg14[%c0_79, %c0_80], %70 {strides = array<i32>} : memref<72x64xf32, #tpu.memory_space<vmem>>, vector<1x64xf32>,
    %c1_81 = arith.constant 1 : index
    %c0_82 = arith.constant 0 : index
    %72 = vector.load %arg14[%c1_81, %c0_82] : memref<72x64xf32, #tpu.memory_space<vmem>>, vector<64x64xf32>
    tpu.vector_store %arg14[%c1_81, %c0_82], %69 {strides = array<i32>} : memref<72x64xf32, #tpu.memory_space<vmem>>, vector<64x64xf32>,
    %cst_83 = arith.constant 0.000000e+00 : f32
    %73 = vector.broadcast %cst_83 : f32 to vector<7x64xf32>
    %c65_84 = arith.constant 65 : index
    %c0_85 = arith.constant 0 : index
    %74 = vector.load %arg14[%c65_84, %c0_85] : memref<72x64xf32, #tpu.memory_space<vmem>>, vector<7x64xf32>
    tpu.vector_store %arg14[%c65_84, %c0_85], %73 {strides = array<i32>} : memref<72x64xf32, #tpu.memory_space<vmem>>, vector<7x64xf32>,
    %c0_86 = arith.constant 0 : index
    %c0_87 = arith.constant 0 : index
    %75 = tpu.strided_load %arg14[%c0_86, %c0_87] {strides = array<i32: 4, 1>} : memref<72x64xf32, #tpu.memory_space<vmem>>, vector<16x64xf32>
    %c1_88 = arith.constant 1 : index
    %c0_89 = arith.constant 0 : index
    %76 = tpu.strided_load %arg14[%c1_88, %c0_89] {strides = array<i32: 4, 1>} : memref<72x64xf32, #tpu.memory_space<vmem>>, vector<16x64xf32>
    %c2_90 = arith.constant 2 : index
    %c0_91 = arith.constant 0 : index
    %77 = tpu.strided_load %arg14[%c2_90, %c0_91] {strides = array<i32: 4, 1>} : memref<72x64xf32, #tpu.memory_space<vmem>>, vector<16x64xf32>
    %78 = tpu.concatenate %75, %76, %77 in 1 : vector<16x64xf32>, vector<16x64xf32>, vector<16x64xf32> -> vector<16x192xf32>
    %c0_92 = arith.constant 0 : index
    %c0_93 = arith.constant 0 : index
    %79 = vector.load %arg7[%c0_92, %c0_93] : memref<192x80xf32, #tpu.memory_space<vmem>>, vector<192x80xf32>
    %cst_94 = arith.constant dense<0.000000e+00> : vector<16x80xf32>
    %80 = tpu.matmul %78, %79, %cst_94 {dimension_numbers = #tpu.dot_dimension_numbers<[1], [0], [0], [1], [0, 0, 1, 1], [], []>} : vector<16x192xf32>, vector<192x80xf32>, vector<16x80xf32> -> vector<16x80xf32>
    %c0_95 = arith.constant 0 : index
    %c0_96 = arith.constant 0 : index
    %81 = vector.load %arg8[%c0_95, %c0_96] : memref<1x80xf32, #tpu.memory_space<vmem>>, vector<1x80xf32>
    %82 = vector.broadcast %81 : vector<1x80xf32> to vector<16x80xf32>
    %83 = arith.addf %80, %82 : vector<16x80xf32>
    %cst_97 = arith.constant 0.000000e+00 : f32
    %84 = vector.broadcast %cst_97 : f32 to vector<16x80xf32>
    %85 = arith.maximumf %83, %84 : vector<16x80xf32>
    %c0_98 = arith.constant 0 : index
    %c0_99 = arith.constant 0 : index
    %86 = vector.load %arg9[%c0_98, %c0_99] : memref<80x128xf32, #tpu.memory_space<vmem>>, vector<80x128xf32>
    %cst_100 = arith.constant dense<0.000000e+00> : vector<16x128xf32>
    %87 = tpu.matmul %85, %86, %cst_100 {dimension_numbers = #tpu.dot_dimension_numbers<[1], [0], [0], [1], [0, 0, 1, 1], [], []>} : vector<16x80xf32>, vector<80x128xf32>, vector<16x128xf32> -> vector<16x128xf32>
    %c0_101 = arith.constant 0 : index
    %c0_102 = arith.constant 0 : index
    %88 = vector.load %arg10[%c0_101, %c0_102] : memref<1x128xf32, #tpu.memory_space<vmem>>, vector<1x128xf32>
    %89 = vector.broadcast %88 : vector<1x128xf32> to vector<16x128xf32>
    %90 = arith.addf %87, %89 : vector<16x128xf32>
    %c0_103 = arith.constant 0 : index
    %c0_104 = arith.constant 0 : index
    %c0_105 = arith.constant 0 : index
    %91 = vector.load %arg11[%c0_103, %c0_104, %c0_105] : memref<1x16x128xf32, #tpu.memory_space<vmem>>, vector<1x16x128xf32>
    %92 = vector.shape_cast %91 : vector<1x16x128xf32> to vector<16x128xf32>
    %93 = vector.shape_cast %90 : vector<16x128xf32> to vector<1x16x128xf32>
    tpu.vector_store %arg11[%c0_103, %c0_104, %c0_105], %93 {strides = array<i32>} : memref<1x16x128xf32, #tpu.memory_space<vmem>>, vector<1x16x128xf32>,
    %94 = arith.mulf %42, %42 : vector<16x80xf32>
    %cst_106 = arith.constant dense<0.000000e+00> : vector<16xf32>
    %95 = vector.multi_reduction <add>, %94, %cst_106 [1] : vector<16x80xf32> to vector<16xf32>
    %96 = vector.shape_cast %95 : vector<16xf32> to vector<16x1xf32>
    %cst_107 = arith.constant 1.000000e-24 : f32
    %97 = vector.broadcast %cst_107 : f32 to vector<16x1xf32>
    %98 = arith.maximumf %96, %97 : vector<16x1xf32>
    %99 = math.rsqrt %98 : vector<16x1xf32>
    %100 = vector.broadcast %99 : vector<16x1xf32> to vector<16x80xf32>
    %101 = arith.mulf %42, %100 : vector<16x80xf32>
    %102 = arith.mulf %85, %85 : vector<16x80xf32>
    %cst_108 = arith.constant dense<0.000000e+00> : vector<16xf32>
    %103 = vector.multi_reduction <add>, %102, %cst_108 [1] : vector<16x80xf32> to vector<16xf32>
    %104 = vector.shape_cast %103 : vector<16xf32> to vector<16x1xf32>
    %cst_109 = arith.constant 1.000000e-24 : f32
    %105 = vector.broadcast %cst_109 : f32 to vector<16x1xf32>
    %106 = arith.maximumf %104, %105 : vector<16x1xf32>
    %107 = math.rsqrt %106 : vector<16x1xf32>
    %108 = vector.broadcast %107 : vector<16x1xf32> to vector<16x80xf32>
    %109 = arith.mulf %85, %108 : vector<16x80xf32>
    %cst_110 = arith.constant dense<0.000000e+00> : vector<16x16xf32>
    %110 = tpu.matmul %101, %109, %cst_110 {dimension_numbers = #tpu.dot_dimension_numbers<[1], [1], [0], [0], [0, 0, 1, 0], [], []>} : vector<16x80xf32>, vector<16x80xf32>, vector<16x16xf32> -> vector<16x16xf32>
    %cst_111 = arith.constant 1.000000e+00 : f32
    %111 = vector.broadcast %cst_111 : f32 to vector<16x16xf32>
    %112 = arith.subf %111, %110 : vector<16x16xf32>
    %cst_112 = arith.constant -1.000000e-01 : f32
    %113 = vector.broadcast %cst_112 : f32 to vector<16x16xf32>
    %114 = arith.mulf %112, %113 : vector<16x16xf32>
    %115 = math.exp %114 : vector<16x16xf32>
    %cst_113 = arith.constant 1.000000e+00 : f32
    %116 = vector.broadcast %cst_113 : f32 to vector<1x16xf32>
    %117 = vector.broadcast %116 : vector<1x16xf32> to vector<16x16xf32>
    %118 = arith.mulf %115, %117 : vector<16x16xf32>
    %cst_114 = arith.constant dense<0.000000e+00> : vector<16xf32>
    %119 = vector.multi_reduction <add>, %118, %cst_114 [1] : vector<16x16xf32> to vector<16xf32>
    %120 = vector.shape_cast %119 : vector<16xf32> to vector<16x1xf32>
    %cst_115 = arith.constant 1.000000e+00 : f32
    %121 = vector.broadcast %cst_115 : f32 to vector<16x1xf32>
    %122 = arith.divf %121, %120 : vector<16x1xf32>
    %123 = vector.broadcast %122 : vector<16x1xf32> to vector<16x16xf32>
    %124 = arith.mulf %115, %123 : vector<16x16xf32>
    %cst_116 = arith.constant dense<0.000000e+00> : vector<16xf32>
    %125 = vector.multi_reduction <add>, %124, %cst_116 [0] : vector<16x16xf32> to vector<16xf32>
    %126 = vector.shape_cast %125 : vector<16xf32> to vector<1x16xf32>
    %cst_117 = arith.constant 1.000000e+00 : f32
    %127 = vector.broadcast %cst_117 : f32 to vector<1x16xf32>
    %128 = arith.divf %127, %126 : vector<1x16xf32>
    %129 = vector.broadcast %128 : vector<1x16xf32> to vector<16x16xf32>
    %130 = arith.mulf %115, %129 : vector<16x16xf32>
    %cst_118 = arith.constant dense<0.000000e+00> : vector<16xf32>
    %131 = vector.multi_reduction <add>, %130, %cst_118 [1] : vector<16x16xf32> to vector<16xf32>
    %132 = vector.shape_cast %131 : vector<16xf32> to vector<16x1xf32>
    %cst_119 = arith.constant 1.000000e+00 : f32
    %133 = vector.broadcast %cst_119 : f32 to vector<16x1xf32>
    %134 = arith.divf %133, %132 : vector<16x1xf32>
    %135 = vector.broadcast %134 : vector<16x1xf32> to vector<16x16xf32>
    %136 = arith.mulf %115, %135 : vector<16x16xf32>
    %cst_120 = arith.constant dense<0.000000e+00> : vector<16xf32>
    %137 = vector.multi_reduction <add>, %136, %cst_120 [0] : vector<16x16xf32> to vector<16xf32>
    %138 = vector.shape_cast %137 : vector<16xf32> to vector<1x16xf32>
    %cst_121 = arith.constant 1.000000e+00 : f32
    %139 = vector.broadcast %cst_121 : f32 to vector<1x16xf32>
    %140 = arith.divf %139, %138 : vector<1x16xf32>
    %141 = vector.broadcast %140 : vector<1x16xf32> to vector<16x16xf32>
    %142 = arith.mulf %115, %141 : vector<16x16xf32>
    %cst_122 = arith.constant dense<0.000000e+00> : vector<16xf32>
    %143 = vector.multi_reduction <add>, %142, %cst_122 [1] : vector<16x16xf32> to vector<16xf32>
    %144 = vector.shape_cast %143 : vector<16xf32> to vector<16x1xf32>
    %cst_123 = arith.constant 1.000000e+00 : f32
    %145 = vector.broadcast %cst_123 : f32 to vector<16x1xf32>
    %146 = arith.divf %145, %144 : vector<16x1xf32>
    %147 = vector.broadcast %146 : vector<16x1xf32> to vector<16x16xf32>
    %148 = arith.mulf %115, %147 : vector<16x16xf32>
    %cst_124 = arith.constant dense<0.000000e+00> : vector<16xf32>
    %149 = vector.multi_reduction <add>, %148, %cst_124 [0] : vector<16x16xf32> to vector<16xf32>
    %150 = vector.shape_cast %149 : vector<16xf32> to vector<1x16xf32>
    %cst_125 = arith.constant 1.000000e+00 : f32
    %151 = vector.broadcast %cst_125 : f32 to vector<1x16xf32>
    %152 = arith.divf %151, %150 : vector<1x16xf32>
    %cst_126 = arith.constant dense<0.000000e+00> : vector<16x1xf32>
    %153 = tpu.matmul %115, %146, %cst_126 {dimension_numbers = #tpu.dot_dimension_numbers<[1], [0], [0], [1], [0, 0, 1, 1], [], []>} : vector<16x16xf32>, vector<16x1xf32>, vector<16x1xf32> -> vector<16x1xf32>
    %154 = vector.broadcast %153 : vector<16x1xf32> to vector<16x16xf32>
    %155 = vector.broadcast %152 : vector<1x16xf32> to vector<16x16xf32>
    %156 = arith.mulf %154, %155 : vector<16x16xf32>
    %157 = arith.mulf %156, %112 : vector<16x16xf32>
    %158 = vector.shape_cast %157 : vector<16x16xf32> to vector<1x16x16xf32>
    %cst_127 = arith.constant dense<0.000000e+00> : vector<1xf32>
    %159 = vector.multi_reduction <add>, %158, %cst_127 [1, 2] : vector<1x16x16xf32> to vector<1xf32>
    %160 = vector.shape_cast %159 : vector<1xf32> to vector<1x1x1xf32>
    %161 = vector.extract %160[0, 0, 0] : f32 from vector<1x1x1xf32>
    %cst_128 = arith.constant 9.99999971E-10 : f32
    %162 = vector.broadcast %cst_128 : f32 to vector<16x16xf32>
    %163 = arith.addf %156, %162 : vector<16x16xf32>
    %164 = math.log %163 : vector<16x16xf32>
    %165 = arith.mulf %156, %164 : vector<16x16xf32>
    %166 = vector.shape_cast %165 : vector<16x16xf32> to vector<1x16x16xf32>
    %cst_129 = arith.constant dense<0.000000e+00> : vector<1xf32>
    %167 = vector.multi_reduction <add>, %166, %cst_129 [1, 2] : vector<1x16x16xf32> to vector<1xf32>
    %168 = vector.shape_cast %167 : vector<1xf32> to vector<1x1x1xf32>
    %169 = vector.extract %168[0, 0, 0] : f32 from vector<1x1x1xf32>
    %170 = arith.subf %161, %169 : f32
    %171 = vector.broadcast %170 : f32 to vector<1x128xf32>
    %c0_130 = arith.constant 0 : index
    %c0_131 = arith.constant 0 : index
    %c0_132 = arith.constant 0 : index
    %172 = vector.load %arg12[%c0_130, %c0_131, %c0_132] : memref<1x1x128xf32, #tpu.memory_space<vmem>>, vector<1x1x128xf32>
    %173 = vector.shape_cast %172 : vector<1x1x128xf32> to vector<1x128xf32>
    %174 = vector.shape_cast %171 : vector<1x128xf32> to vector<1x1x128xf32>
    tpu.vector_store %arg12[%c0_130, %c0_131, %c0_132], %174 {strides = array<i32>} : memref<1x1x128xf32, #tpu.memory_space<vmem>>, vector<1x1x128xf32>,
    return
  }
  func.func @transform_0(%arg0: i32) -> (i32, i32, i32) {
    %c0_i32 = arith.constant 0 : i32
    %c0_i32_0 = arith.constant 0 : i32
    %c0_i32_1 = arith.constant 0 : i32
    return %arg0, %c0_i32, %c0_i32_0 : i32, i32, i32
  }
  func.func @transform_1(%arg0: i32) -> (i32, i32, i32) {
    %c0_i32 = arith.constant 0 : i32
    %c0_i32_0 = arith.constant 0 : i32
    %c0_i32_1 = arith.constant 0 : i32
    return %arg0, %c0_i32, %c0_i32_0 : i32, i32, i32
  }
  func.func @transform_2(%arg0: i32) -> (i32, i32) {
    %c0_i32 = arith.constant 0 : i32
    %c0_i32_0 = arith.constant 0 : i32
    %c0_i32_1 = arith.constant 0 : i32
    return %c0_i32, %c0_i32_0 : i32, i32
  }
  func.func @transform_3(%arg0: i32) -> (i32, i32) {
    %c0_i32 = arith.constant 0 : i32
    %c0_i32_0 = arith.constant 0 : i32
    %c0_i32_1 = arith.constant 0 : i32
    return %c0_i32, %c0_i32_0 : i32, i32
  }
  func.func @transform_4(%arg0: i32) -> (i32, i32) {
    %c0_i32 = arith.constant 0 : i32
    %c0_i32_0 = arith.constant 0 : i32
    %c0_i32_1 = arith.constant 0 : i32
    return %c0_i32, %c0_i32_0 : i32, i32
  }
  func.func @transform_5(%arg0: i32) -> (i32, i32) {
    %c0_i32 = arith.constant 0 : i32
    %c0_i32_0 = arith.constant 0 : i32
    %c0_i32_1 = arith.constant 0 : i32
    return %c0_i32, %c0_i32_0 : i32, i32
  }
  func.func @transform_6(%arg0: i32) -> (i32, i32) {
    %c0_i32 = arith.constant 0 : i32
    %c0_i32_0 = arith.constant 0 : i32
    %c0_i32_1 = arith.constant 0 : i32
    return %c0_i32, %c0_i32_0 : i32, i32
  }
  func.func @transform_7(%arg0: i32) -> (i32, i32) {
    %c0_i32 = arith.constant 0 : i32
    %c0_i32_0 = arith.constant 0 : i32
    %c0_i32_1 = arith.constant 0 : i32
    return %c0_i32, %c0_i32_0 : i32, i32
  }
  func.func @transform_8(%arg0: i32) -> (i32, i32) {
    %c0_i32 = arith.constant 0 : i32
    %c0_i32_0 = arith.constant 0 : i32
    %c0_i32_1 = arith.constant 0 : i32
    return %c0_i32, %c0_i32_0 : i32, i32
  }
  func.func @transform_9(%arg0: i32) -> (i32, i32) {
    %c0_i32 = arith.constant 0 : i32
    %c0_i32_0 = arith.constant 0 : i32
    %c0_i32_1 = arith.constant 0 : i32
    return %c0_i32, %c0_i32_0 : i32, i32
  }
  func.func @transform_10(%arg0: i32) -> (i32, i32, i32) {
    %c0_i32 = arith.constant 0 : i32
    %c0_i32_0 = arith.constant 0 : i32
    %c0_i32_1 = arith.constant 0 : i32
    return %arg0, %c0_i32, %c0_i32_0 : i32, i32, i32
  }
  func.func @transform_11(%arg0: i32) -> (i32, i32, i32) {
    %c0_i32 = arith.constant 0 : i32
    %c0_i32_0 = arith.constant 0 : i32
    %c0_i32_1 = arith.constant 0 : i32
    return %arg0, %c0_i32, %c0_i32_0 : i32, i32, i32
  }
}

</mosaic_0001>

<llo_original>
// kernel: sekws_forward.1
$region0: #{sekws_forward.1}
  #allocation0 [shape = 'u32[]', space=smem, size = 0x4, offset = 0x4, fixed_abs, tag = 'smem constant byte address 0x4 - core index']
  #allocation1 [shape = 'u32[72,128]{1,0:T(1,128)}', space=vmem, size = 0x9000, scoped, tag = 'internal scratch']
  #allocation2 [shape = 'f32[264,32]{1,0:T(8,128)}', space=vmem, size = 0x21000, scoped, tag = 'scratch operand']
  #allocation3 [shape = 'f32[72,64]{1,0:T(8,128)}', space=vmem, size = 0x9000, scoped, tag = 'scratch operand']
  %s0 = inlined_call_operand.vmem [shape: f32[2,5,256], index: 0, kind: input, shape index: {}]
  %s1 = inlined_call_operand.vmem [shape: f32[2,5,256], index: 1, kind: input, shape index: {}]
  %s2 = inlined_call_operand.vmem [shape: f32[5,32], index: 2, kind: input, shape index: {}]
  %s3 = inlined_call_operand.vmem [shape: f32[1,32], index: 3, kind: input, shape index: {}]
  %s4 = inlined_call_operand.vmem [shape: f32[160,64], index: 4, kind: input, shape index: {}]
  %s5 = inlined_call_operand.vmem [shape: f32[1,64], index: 5, kind: input, shape index: {}]
  %s6 = inlined_call_operand.vmem [shape: f32[192,80], index: 6, kind: input, shape index: {}]
  %s7 = inlined_call_operand.vmem [shape: f32[1,80], index: 7, kind: input, shape index: {}]
  %s8 = inlined_call_operand.vmem [shape: f32[80,128], index: 8, kind: input, shape index: {}]
  %s9 = inlined_call_operand.vmem [shape: f32[1,128], index: 9, kind: input, shape index: {}]
  %s10 = inlined_call_operand.vmem [shape: f32[2,16,128], index: 10, kind: output, shape index: {0}]
  %s11 = inlined_call_operand.vmem [shape: f32[2,1,128], index: 11, kind: output, shape index: {1}]
  %12 = xla_tuple %s10, %s11
  %s13 = sld [smem:[#allocation0]]
  $region81: #{sekws_forward.1} parent=0
    _
  %s15 = ssub.s32 1, %s13
  %s16 = scalar_select 0, %s15, %s13
  loop: start=0, step=1, limit=4
  $region2: #{sekws_forward.1} parent=0 // loop_pre_header
    _
  $region3: #{sekws_forward.1} parent=0 // loop_header
    %s18 = sphi 0, %s22
    %p19 = scmp.ge.s32.totalorder %s18, 4
    %s28 = sphi 0, %s30
    %s31 = sphi 0, %s28
    %s32 = sphi 0, %s31
    %s48 = sphi 0, %s32
    %s54 = sphi 0, %s56
    %s57 = sphi 0, %s54
    %s58 = sphi 0, %s57
    %s74 = sphi 0, %s58
    %s78 = sphi 0, %s78
    %s80 = sphi 0, %s78
    %s81 = sphi 0, %s80
    %s95 = sphi 0, %s81
    %s99 = sphi 0, %s99
    %s101 = sphi 0, %s99
    %s102 = sphi 0, %s101
    %s116 = sphi 0, %s102
    %s120 = sphi 0, %s120
    %s122 = sphi 0, %s120
    %s123 = sphi 0, %s122
    %s137 = sphi 0, %s123
    %s141 = sphi 0, %s141
    %s143 = sphi 0, %s141
    %s144 = sphi 0, %s143
    %s158 = sphi 0, %s144
    %s162 = sphi 0, %s162
    %s164 = sphi 0, %s162
    %s165 = sphi 0, %s164
    %s179 = sphi 0, %s165
    %s183 = sphi 0, %s183
    %s185 = sphi 0, %s183
    %s186 = sphi 0, %s185
    %s200 = sphi 0, %s186
    %s204 = sphi 0, %s204
    %s206 = sphi 0, %s204
    %s207 = sphi 0, %s206
    %s221 = sphi 0, %s207
    %s225 = sphi 0, %s225
    %s227 = sphi 0, %s225
    %s228 = sphi 0, %s227
    %s242 = sphi 0, %s228
    %s248 = sphi 0, %s250
    %s251 = sphi 0, %s248
    %s252 = sphi 0, %s251
    %s268 = sphi 0, %s252
    %s274 = sphi 0, %s276
    %s277 = sphi 0, %s274
    %s278 = sphi 0, %s277
    %s294 = sphi 0, %s278
  $region4: #{sekws_forward.1} parent=0 // loop_header_branch
    %21 = sbr.rel (%p19) target = $region8
  $region5: #{sekws_forward.1} parent=0 // loop_body
    %s23 = ssub.s32 %s18, 1
    %s24 = ssub.s32 %s18, 2
    %s25 = sadd.s32 %s18, 1
    %s26 = ssub.s32 %s18, %s25
    %p27 = scmp.eq.s32.totalorder %s26, 0
    %s29 = sadd.s32 %s28, 1
    %s30 = scalar_select %p27, %s28, %s29
    %p33 = pneg %p27
    %p34 = scmp.eq.s32.totalorder %s18, 1
    %p35 = por %p33, %p34
    %p36 = scmp.ne.s32.totalorder %s28, %s31
    %p37 = scmp.eq.s32.totalorder %s18, 0
    %p38 = por %p36, %p37
    %p39 = scmp.ne.s32.totalorder %s28, %s31
    %p40 = scmp.eq.s32.totalorder %s23, 1
    %p41 = por %p39, %p40
    %p42 = scmp.ne.s32.totalorder %s31, %s32
    %p43 = scmp.eq.s32.totalorder %s23, 0
    %p44 = por %p42, %p43
    %p45 = scmp.ne.s32.totalorder %s31, %s32
    %p46 = scmp.eq.s32.totalorder %s24, 1
    %p47 = por %p45, %p46
    %p49 = scmp.ne.s32.totalorder %s32, %s48
    %p50 = scmp.eq.s32.totalorder %s24, 0
    %p51 = por %p49, %p50
    %s52 = ssub.s32 %s18, %s25
    %p53 = scmp.eq.s32.totalorder %s52, 0
    %s55 = sadd.s32 %s54, 1
    %s56 = scalar_select %p53, %s54, %s55
    %p59 = pneg %p53
    %p60 = scmp.eq.s32.totalorder %s18, 1
    %p61 = por %p59, %p60
    %p62 = scmp.ne.s32.totalorder %s54, %s57
    %p63 = scmp.eq.s32.totalorder %s18, 0
    %p64 = por %p62, %p63
    %p65 = scmp.ne.s32.totalorder %s54, %s57
    %p66 = scmp.eq.s32.totalorder %s23, 1
    %p67 = por %p65, %p66
    %p68 = scmp.ne.s32.totalorder %s57, %s58
    %p69 = scmp.eq.s32.totalorder %s23, 0
    %p70 = por %p68, %p69
    %p71 = scmp.ne.s32.totalorder %s57, %s58
    %p72 = scmp.eq.s32.totalorder %s24, 1
    %p73 = por %p71, %p72
    %p75 = scmp.ne.s32.totalorder %s58, %s74
    %p76 = scmp.eq.s32.totalorder %s24, 0
    %p77 = por %p75, %p76
    %s79 = sadd.s32 %s78, 1
    %p82 = scmp.eq.s32.totalorder %s18, 1
    %p83 = scmp.ne.s32.totalorder %s78, %s80
    %p84 = scmp.eq.s32.totalorder %s18, 0
    %p85 = por %p83, %p84
    %p86 = scmp.ne.s32.totalorder %s78, %s80
    %p87 = scmp.eq.s32.totalorder %s23, 1
    %p88 = por %p86, %p87
    %p89 = scmp.ne.s32.totalorder %s80, %s81
    %p90 = scmp.eq.s32.totalorder %s23, 0
    %p91 = por %p89, %p90
    %p92 = scmp.ne.s32.totalorder %s80, %s81
    %p93 = scmp.eq.s32.totalorder %s24, 1
    %p94 = por %p92, %p93
    %p96 = scmp.ne.s32.totalorder %s81, %s95
    %p97 = scmp.eq.s32.totalorder %s24, 0
    %p98 = por %p96, %p97
    %s100 = sadd.s32 %s99, 1
    %p103 = scmp.eq.s32.totalorder %s18, 1
    %p104 = scmp.ne.s32.totalorder %s99, %s101
    %p105 = scmp.eq.s32.totalorder %s18, 0
    %p106 = por %p104, %p105
    %p107 = scmp.ne.s32.totalorder %s99, %s101
    %p108 = scmp.eq.s32.totalorder %s23, 1
    %p109 = por %p107, %p108
    %p110 = scmp.ne.s32.totalorder %s101, %s102
    %p111 = scmp.eq.s32.totalorder %s23, 0
    %p112 = por %p110, %p111
    %p113 = scmp.ne.s32.totalorder %s101, %s102
    %p114 = scmp.eq.s32.totalorder %s24, 1
    %p115 = por %p113, %p114
    %p117 = scmp.ne.s32.totalorder %s102, %s116
    %p118 = scmp.eq.s32.totalorder %s24, 0
    %p119 = por %p117, %p118
    %s121 = sadd.s32 %s120, 1
    %p124 = scmp.eq.s32.totalorder %s18, 1
    %p125 = scmp.ne.s32.totalorder %s120, %s122
    %p126 = scmp.eq.s32.totalorder %s18, 0
    %p127 = por %p125, %p126
    %p128 = scmp.ne.s32.totalorder %s120, %s122
    %p129 = scmp.eq.s32.totalorder %s23, 1
    %p130 = por %p128, %p129
    %p131 = scmp.ne.s32.totalorder %s122, %s123
    %p132 = scmp.eq.s32.totalorder %s23, 0
    %p133 = por %p131, %p132
    %p134 = scmp.ne.s32.totalorder %s122, %s123
    %p135 = scmp.eq.s32.totalorder %s24, 1
    %p136 = por %p134, %p135
    %p138 = scmp.ne.s32.totalorder %s123, %s137
    %p139 = scmp.eq.s32.totalorder %s24, 0
    %p140 = por %p138, %p139
    %s142 = sadd.s32 %s141, 1
    %p145 = scmp.eq.s32.totalorder %s18, 1
    %p146 = scmp.ne.s32.totalorder %s141, %s143
    %p147 = scmp.eq.s32.totalorder %s18, 0
    %p148 = por %p146, %p147
    %p149 = scmp.ne.s32.totalorder %s141, %s143
    %p150 = scmp.eq.s32.totalorder %s23, 1
    %p151 = por %p149, %p150
    %p152 = scmp.ne.s32.totalorder %s143, %s144
    %p153 = scmp.eq.s32.totalorder %s23, 0
    %p154 = por %p152, %p153
    %p155 = scmp.ne.s32.totalorder %s143, %s144
    %p156 = scmp.eq.s32.totalorder %s24, 1
    %p157 = por %p155, %p156
    %p159 = scmp.ne.s32.totalorder %s144, %s158
    %p160 = scmp.eq.s32.totalorder %s24, 0
    %p161 = por %p159, %p160
    %s163 = sadd.s32 %s162, 1
    %p166 = scmp.eq.s32.totalorder %s18, 1
    %p167 = scmp.ne.s32.totalorder %s162, %s164
    %p168 = scmp.eq.s32.totalorder %s18, 0
    %p169 = por %p167, %p168
    %p170 = scmp.ne.s32.totalorder %s162, %s164
    %p171 = scmp.eq.s32.totalorder %s23, 1
    %p172 = por %p170, %p171
    %p173 = scmp.ne.s32.totalorder %s164, %s165
    %p174 = scmp.eq.s32.totalorder %s23, 0
    %p175 = por %p173, %p174
    %p176 = scmp.ne.s32.totalorder %s164, %s165
    %p177 = scmp.eq.s32.totalorder %s24, 1
    %p178 = por %p176, %p177
    %p180 = scmp.ne.s32.totalorder %s165, %s179
    %p181 = scmp.eq.s32.totalorder %s24, 0
    %p182 = por %p180, %p181
    %s184 = sadd.s32 %s183, 1
    %p187 = scmp.eq.s32.totalorder %s18, 1
    %p188 = scmp.ne.s32.totalorder %s183, %s185
    %p189 = scmp.eq.s32.totalorder %s18, 0
    %p190 = por %p188, %p189
    %p191 = scmp.ne.s32.totalorder %s183, %s185
    %p192 = scmp.eq.s32.totalorder %s23, 1
    %p193 = por %p191, %p192
    %p194 = scmp.ne.s32.totalorder %s185, %s186
    %p195 = scmp.eq.s32.totalorder %s23, 0
    %p196 = por %p194, %p195
    %p197 = scmp.ne.s32.totalorder %s185, %s186
    %p198 = scmp.eq.s32.totalorder %s24, 1
    %p199 = por %p197, %p198
    %p201 = scmp.ne.s32.totalorder %s186, %s200
    %p202 = scmp.eq.s32.totalorder %s24, 0
    %p203 = por %p201, %p202
    %s205 = sadd.s32 %s204, 1
    %p208 = scmp.eq.s32.totalorder %s18, 1
    %p209 = scmp.ne.s32.totalorder %s204, %s206
    %p210 = scmp.eq.s32.totalorder %s18, 0
    %p211 = por %p209, %p210
    %p212 = scmp.ne.s32.totalorder %s204, %s206
    %p213 = scmp.eq.s32.totalorder %s23, 1
    %p214 = por %p212, %p213
    %p215 = scmp.ne.s32.totalorder %s206, %s207
    %p216 = scmp.eq.s32.totalorder %s23, 0
    %p217 = por %p215, %p216
    %p218 = scmp.ne.s32.totalorder %s206, %s207
    %p219 = scmp.eq.s32.totalorder %s24, 1
    %p220 = por %p218, %p219
    %p222 = scmp.ne.s32.totalorder %s207, %s221
    %p223 = scmp.eq.s32.totalorder %s24, 0
    %p224 = por %p222, %p223
    %s226 = sadd.s32 %s225, 1
    %p229 = scmp.eq.s32.totalorder %s18, 1
    %p230 = scmp.ne.s32.totalorder %s225, %s227
    %p231 = scmp.eq.s32.totalorder %s18, 0
    %p232 = por %p230, %p231
    %p233 = scmp.ne.s32.totalorder %s225, %s227
    %p234 = scmp.eq.s32.totalorder %s23, 1
    %p235 = por %p233, %p234
    %p236 = scmp.ne.s32.totalorder %s227, %s228
    %p237 = scmp.eq.s32.totalorder %s23, 0
    %p238 = por %p236, %p237
    %p239 = scmp.ne.s32.totalorder %s227, %s228
    %p240 = scmp.eq.s32.totalorder %s24, 1
    %p241 = por %p239, %p240
    %p243 = scmp.ne.s32.totalorder %s228, %s242
    %p244 = scmp.eq.s32.totalorder %s24, 0
    %p245 = por %p243, %p244
    %s246 = ssub.s32 %s18, %s25
    %p247 = scmp.eq.s32.totalorder %s246, 0
    %s249 = sadd.s32 %s248, 1
    %s250 = scalar_select %p247, %s248, %s249
    %p253 = pneg %p247
    %p254 = scmp.eq.s32.totalorder %s18, 1
    %p255 = por %p253, %p254
    %p256 = scmp.ne.s32.totalorder %s248, %s251
    %p257 = scmp.eq.s32.totalorder %s18, 0
    %p258 = por %p256, %p257
    %p259 = scmp.ne.s32.totalorder %s248, %s251
    %p260 = scmp.eq.s32.totalorder %s23, 1
    %p261 = por %p259, %p260
    %p262 = scmp.ne.s32.totalorder %s251, %s252
    %p263 = scmp.eq.s32.totalorder %s23, 0
    %p264 = por %p262, %p263
    %p265 = scmp.ne.s32.totalorder %s251, %s252
    %p266 = scmp.eq.s32.totalorder %s24, 1
    %p267 = por %p265, %p266
    %p269 = scmp.ne.s32.totalorder %s252, %s268
    %p270 = scmp.eq.s32.totalorder %s24, 0
    %p271 = por %p269, %p270
    %s272 = ssub.s32 %s18, %s25
    %p273 = scmp.eq.s32.totalorder %s272, 0
    %s275 = sadd.s32 %s274, 1
    %s276 = scalar_select %p273, %s274, %s275
    %p279 = pneg %p273
    %p280 = scmp.eq.s32.totalorder %s18, 1
    %p281 = por %p279, %p280
    %p282 = scmp.ne.s32.totalorder %s274, %s277
    %p283 = scmp.eq.s32.totalorder %s18, 0
    %p284 = por %p282, %p283
    %p285 = scmp.ne.s32.totalorder %s274, %s277
    %p286 = scmp.eq.s32.totalorder %s23, 1
    %p287 = por %p285, %p286
    %p288 = scmp.ne.s32.totalorder %s277, %s278
    %p289 = scmp.eq.s32.totalorder %s23, 0
    %p290 = por %p288, %p289
    %p291 = scmp.ne.s32.totalorder %s277, %s278
    %p292 = scmp.eq.s32.totalorder %s24, 1
    %p293 = por %p291, %p292
    %p295 = scmp.ne.s32.totalorder %s278, %s294
    %p296 = scmp.eq.s32.totalorder %s24, 0
    %p297 = por %p295, %p296
    %p298 = scmp.le.s32.totalorder 1, %s18
    %p299 = scmp.lt.s32.totalorder %s18, 3
    %p300 = pnand %p298, %p299
    %p301 = pneg %p300
    // Predicated region
    $region9: #{sekws_forward.1} parent=5 // pred_check
      _
    $region10: #{sekws_forward.1} parent=5 // pred_check_branch
      %303 = sbr.rel (%p300) target = $region12
    $region11: #{sekws_forward.1} parent=5 // pred_region
      %s304 = ssub.s32 %s18, 1
      // Predicated region
      $region13: #{sekws_forward.1} parent=11 // pred_check
        %p305 = pneg %p91
      $region14: #{sekws_forward.1} parent=11 // pred_check_branch
        %307 = sbr.rel (%p305) target = $region16
      $region15: #{sekws_forward.1} parent=11 // pred_region
        _
      $region16: #{sekws_forward.1} parent=11 // pred_fallthru
        _
      // Predicated region
      $region17: #{sekws_forward.1} parent=11 // pred_check
        %p308 = pneg %p112
      $region18: #{sekws_forward.1} parent=11 // pred_check_branch
        %310 = sbr.rel (%p308) target = $region20
      $region19: #{sekws_forward.1} parent=11 // pred_region
        _
      $region20: #{sekws_forward.1} parent=11 // pred_fallthru
        _
      // Predicated region
      $region21: #{sekws_forward.1} parent=11 // pred_check
        %p311 = pneg %p133
      $region22: #{sekws_forward.1} parent=11 // pred_check_branch
        %313 = sbr.rel (%p311) target = $region24
      $region23: #{sekws_forward.1} parent=11 // pred_region
        _
      $region24: #{sekws_forward.1} parent=11 // pred_fallthru
        _
      // Predicated region
      $region25: #{sekws_forward.1} parent=11 // pred_check
        %p314 = pneg %p154
      $region26: #{sekws_forward.1} parent=11 // pred_check_branch
        %316 = sbr.rel (%p314) target = $region28
      $region27: #{sekws_forward.1} parent=11 // pred_region
        _
      $region28: #{sekws_forward.1} parent=11 // pred_fallthru
        _
      // Predicated region
      $region29: #{sekws_forward.1} parent=11 // pred_check
        %p317 = pneg %p175
      $region30: #{sekws_forward.1} parent=11 // pred_check_branch
        %319 = sbr.rel (%p317) target = $region32
      $region31: #{sekws_forward.1} parent=11 // pred_region
        _
      $region32: #{sekws_forward.1} parent=11 // pred_fallthru
        _
      // Predicated region
      $region33: #{sekws_forward.1} parent=11 // pred_check
        %p320 = pneg %p196
      $region34: #{sekws_forward.1} parent=11 // pred_check_branch
        %322 = sbr.rel (%p320) target = $region36
      $region35: #{sekws_forward.1} parent=11 // pred_region
        _
      $region36: #{sekws_forward.1} parent=11 // pred_fallthru
        _
      // Predicated region
      $region37: #{sekws_forward.1} parent=11 // pred_check
        %p323 = pneg %p217
      $region38: #{sekws_forward.1} parent=11 // pred_check_branch
        %325 = sbr.rel (%p323) target = $region40
      $region39: #{sekws_forward.1} parent=11 // pred_region
        _
      $region40: #{sekws_forward.1} parent=11 // pred_fallthru
        _
      // Predicated region
      $region41: #{sekws_forward.1} parent=11 // pred_check
        %p326 = pneg %p238
      $region42: #{sekws_forward.1} parent=11 // pred_check_branch
        %328 = sbr.rel (%p326) target = $region44
      $region43: #{sekws_forward.1} parent=11 // pred_region
        _
      $region44: #{sekws_forward.1} parent=11 // pred_fallthru
        _
    $region12: #{sekws_forward.1} parent=5 // pred_fallthru
      _
    %p329 = scmp.lt.s32.totalorder %s18, 2
    // Predicated region
    $region45: #{sekws_forward.1} parent=5 // pred_check
      %p330 = pneg %p329
    $region46: #{sekws_forward.1} parent=5 // pred_check_branch
      %332 = sbr.rel (%p330) target = $region48
    $region47: #{sekws_forward.1} parent=5 // pred_region
      // Predicated region
      $region49: #{sekws_forward.1} parent=47 // pred_check
        %p333 = pneg %p38
      $region50: #{sekws_forward.1} parent=47 // pred_check_branch
        %335 = sbr.rel (%p333) target = $region52
      $region51: #{sekws_forward.1} parent=47 // pred_region
        %p336 = scmp.lt.s32.totalorder %s18, 1
        %s337 = scalar_select %p336, %s18, 1
        %s338 = smul.addr %s337, 2
        %s339 = smul.addr %s338, 8
        %s340 = scalar_lea.vmem %s0, %s339
      $region52: #{sekws_forward.1} parent=47 // pred_fallthru
        _
      // Predicated region
      $region53: #{sekws_forward.1} parent=47 // pred_check
        %p341 = pneg %p64
      $region54: #{sekws_forward.1} parent=47 // pred_check_branch
        %343 = sbr.rel (%p341) target = $region56
      $region55: #{sekws_forward.1} parent=47 // pred_region
        %p344 = scmp.lt.s32.totalorder %s18, 1
        %s345 = scalar_select %p344, %s18, 1
        %s346 = smul.addr %s345, 2
        %s347 = smul.addr %s346, 8
        %s348 = scalar_lea.vmem %s1, %s347
      $region56: #{sekws_forward.1} parent=47 // pred_fallthru
        _
    $region48: #{sekws_forward.1} parent=5 // pred_fallthru
      _
    %p349 = scmp.le.s32.totalorder 1, %s18
    %p350 = scmp.lt.s32.totalorder %s18, 3
    %p351 = pnand %p349, %p350
    %p352 = pneg %p351
    // Predicated region
    $region57: #{sekws_forward.1} parent=5 // pred_check
      _
    $region58: #{sekws_forward.1} parent=5 // pred_check_branch
      %354 = sbr.rel (%p351) target = $region60
    $region59: #{sekws_forward.1} parent=5 // pred_region
      %s355 = ssub.s32 %s18, 1
      %p356 = scmp.lt.s32.totalorder %s23, 1
      %s357 = scalar_select %p356, %s23, 1
      %s358 = smul.addr %s357, 2
      %s359 = smul.addr %s358, 8
      %s360 = scalar_lea.vmem %s0, %s359
      %p361 = pneg %p44
      %p362 = pneg %p41
      %p363 = scmp.lt.s32.totalorder %s23, 1
      %s364 = scalar_select %p363, %s23, 1
      %s365 = smul.addr %s364, 2
      %s366 = smul.addr %s365, 8
      %s367 = scalar_lea.vmem %s1, %s366
      %p368 = pneg %p70
      %p369 = pneg %p67
      %p370 = pneg %p91
      %p371 = pneg %p88
      %p372 = pneg %p112
      %p373 = pneg %p109
      %p374 = pneg %p133
      %p375 = pneg %p130
      %p376 = pneg %p154
      %p377 = pneg %p151
      %p378 = pneg %p175
      %p379 = pneg %p172
      %p380 = pneg %p196
      %p381 = pneg %p193
      %p382 = pneg %p217
      %p383 = pneg %p214
      %p384 = pneg %p238
      %p385 = pneg %p235
      %p386 = pneg %p264
      %p387 = pneg %p261
      %p388 = scmp.lt.s32.totalorder %s23, 1
      %s389 = scalar_select %p388, %s23, 1
      %s390 = smul.addr %s389, 2
      %s391 = smul.addr %s390, 8
      %s392 = scalar_lea.vmem %s10, %s391
      %p393 = pneg %p290
      %p394 = pneg %p287
      %p395 = scmp.lt.s32.totalorder %s23, 1
      %s396 = scalar_select %p395, %s23, 1
      %s397 = scalar_lea.vmem %s11, %s396
      %p398 = scmp.lt.s32.totalorder %s23, 1
      %s399 = scalar_select %p398, %s23, 1
      %s400 = smul.addr %s399, 2
      %s401 = smul.addr %s400, 8
      %s402 = scalar_lea.vmem %s0, %s401
      %p403 = scmp.lt.s32.totalorder %s23, 1
      %s404 = scalar_select %p403, %s23, 1
      %s405 = smul.addr %s404, 2
      %s406 = smul.addr %s405, 8
      %s407 = scalar_lea.vmem %s1, %s406
      %p408 = scmp.lt.s32.totalorder %s23, 1
      %s409 = scalar_select %p408, %s23, 1
      %s410 = smul.addr %s409, 2
      %s411 = smul.addr %s410, 8
      %s412 = scalar_lea.vmem %s10, %s411
      %p413 = scmp.lt.s32.totalorder %s23, 1
      %s414 = scalar_select %p413, %s23, 1
      %s415 = scalar_lea.vmem %s11, %s414
      %v416 = vld [vmem:[%s402] sm:$0x1f]
      %v417 = vld [vmem:[%s402 + $0x8] sm:$0x1f]
      %v418 = vld [vmem:[%s2] sm:$0x1f]
      %v419 = vld [vmem:[%s3] sm:$0x1]
      %v421 = vperm.slane %v419, 0
      %423 = vxpose.xlu0.b32.start [1/16] %v416, 128
      %424 = vxpose.xlu0.b32.cont [2/16] 0.0, 128
      %425 = vxpose.xlu0.b32.cont [3/16] 0.0, 128
      %426 = vxpose.xlu0.b32.cont [4/16] 0.0, 128
      %427 = vxpose.xlu0.b32.cont [5/16] 0.0, 128
      %428 = vxpose.xlu0.b32.cont [6/16] 0.0, 128
      %429 = vxpose.xlu0.b32.cont [7/16] 0.0, 128
      %430 = vxpose.xlu0.b32.cont [8/16] 0.0, 128
      %431 = vxpose.xlu0.b32.cont [9/16] 0.0, 128
      %432 = vxpose.xlu0.b32.cont [10/16] 0.0, 128
      %433 = vxpose.xlu0.b32.cont [11/16] 0.0, 128
      %434 = vxpose.xlu0.b32.cont [12/16] 0.0, 128
      %435 = vxpose.xlu0.b32.cont [13/16] 0.0, 128
      %436 = vxpose.xlu0.b32.cont [14/16] 0.0, 128
      %437 = vxpose.xlu0.b32.cont [15/16] 0.0, 128
      %438 = vxpose.xlu0.b32.end [16/16] 0.0, 128
      %v439 = vpop.trf.xlu0
      %v440 = vpop.trf.xlu0
      %v441 = vpop.trf.xlu0
      %v442 = vpop.trf.xlu0
      %v443 = vpop.trf.xlu0
      %v444 = vpop.trf.xlu0
      %v445 = vpop.trf.xlu0
      %v446 = vpop.trf.xlu0
      %v447 = vpop.trf.xlu0
      %v448 = vpop.trf.xlu0
      %v449 = vpop.trf.xlu0
      %v450 = vpop.trf.xlu0
      %v451 = vpop.trf.xlu0
      %v452 = vpop.trf.xlu0
      %v453 = vpop.trf.xlu0
      %v454 = vpop.trf.xlu0
      %455 = vxpose.xlu0.b32.start [1/16] %v417, 128
      %456 = vxpose.xlu0.b32.cont [2/16] 0.0, 128
      %457 = vxpose.xlu0.b32.cont [3/16] 0.0, 128
      %458 = vxpose.xlu0.b32.cont [4/16] 0.0, 128
      %459 = vxpose.xlu0.b32.cont [5/16] 0.0, 128
      %460 = vxpose.xlu0.b32.cont [6/16] 0.0, 128
      %461 = vxpose.xlu0.b32.cont [7/16] 0.0, 128
      %462 = vxpose.xlu0.b32.cont [8/16] 0.0, 128
      %463 = vxpose.xlu0.b32.cont [9/16] 0.0, 128
      %464 = vxpose.xlu0.b32.cont [10/16] 0.0, 128
      %465 = vxpose.xlu0.b32.cont [11/16] 0.0, 128
      %466 = vxpose.xlu0.b32.cont [12/16] 0.0, 128
      %467 = vxpose.xlu0.b32.cont [13/16] 0.0, 128
      %468 = vxpose.xlu0.b32.cont [14/16] 0.0, 128
      %469 = vxpose.xlu0.b32.cont [15/16] 0.0, 128
      %470 = vxpose.xlu0.b32.end [16/16] 0.0, 128
      %v471 = vpop.trf.xlu0
      %v472 = vpop.trf.xlu0
      %v473 = vpop.trf.xlu0
      %v474 = vpop.trf.xlu0
      %v475 = vpop.trf.xlu0
      %v476 = vpop.trf.xlu0
      %v477 = vpop.trf.xlu0
      %v478 = vpop.trf.xlu0
      %v479 = vpop.trf.xlu0
      %v480 = vpop.trf.xlu0
      %v481 = vpop.trf.xlu0
      %v482 = vpop.trf.xlu0
      %v483 = vpop.trf.xlu0
      %v484 = vpop.trf.xlu0
      %v485 = vpop.trf.xlu0
      %v486 = vpop.trf.xlu0
      %vm487 = vcmask 39936
      %v489 = vsel %vm487, %v439, 0
      %v492 = vsel %vm487, %v440, 0
      %v495 = vsel %vm487, %v441, 0
      %v498 = vsel %vm487, %v442, 0
      %v501 = vsel %vm487, %v443, 0
      %v504 = vsel %vm487, %v444, 0
      %v507 = vsel %vm487, %v445, 0
      %v510 = vsel %vm487, %v446, 0
      %v513 = vsel %vm487, %v447, 0
      %v516 = vsel %vm487, %v448, 0
      %v519 = vsel %vm487, %v449, 0
      %v522 = vsel %vm487, %v450, 0
      %v525 = vsel %vm487, %v451, 0
      %v528 = vsel %vm487, %v452, 0
      %v531 = vsel %vm487, %v453, 0
      %v534 = vsel %vm487, %v454, 0
      %v537 = vsel %vm487, %v471, 0
      %v540 = vsel %vm487, %v472, 0
      %v543 = vsel %vm487, %v473, 0
      %v546 = vsel %vm487, %v474, 0
      %v549 = vsel %vm487, %v475, 0
      %v552 = vsel %vm487, %v476, 0
      %v555 = vsel %vm487, %v477, 0
      %v558 = vsel %vm487, %v478, 0
      %v561 = vsel %vm487, %v479, 0
      %v564 = vsel %vm487, %v480, 0
      %v567 = vsel %vm487, %v481, 0
      %v570 = vsel %vm487, %v482, 0
      %v573 = vsel %vm487, %v483, 0
      %v576 = vsel %vm487, %v484, 0
      %v579 = vsel %vm487, %v485, 0
      %v582 = vsel %vm487, %v486, 0
      %vm584 = vcmask 1044480
      %v586 = vsel %vm584, %v418, 0
      %588 = vmatpush.msra.mxu0 0.0
      %589 = vmatpush.msra.mxu0 0.0
      %590 = vmatpush.msra.mxu0 0.0
      %591 = vmatpush.msra.mxu0 0.0
      %592 = vmatpush.msra.mxu0 0.0
      %593 = vmatpush.msra.mxu0 0.0
      %594 = vmatpush.msra.mxu0 0.0
      %595 = vmatpush.msra.mxu0 0.0
      %596 = vmatpush.msra.mxu0 0.0
      %597 = vmatpush.msra.mxu0 0.0
      %598 = vmatpush.msra.mxu0 0.0
      %599 = vmatpush.msra.mxu0 0.0
      %600 = vmatpush.msra.mxu0 0.0
      %601 = vmatpush.msra.mxu0 0.0
      %602 = vmatpush.msra.mxu0 0.0
      %603 = vmatpush.msra.mxu0 %v586
      %604 = vmatmul.f32.gmra.mxu0 %v489
      %v605 = vpop.f32.mrf.mxu0
      %v606 = vadd.f32 %v421, %v605
      %607 = vmatmul.f32.gmra.mxu0 %v492
      %v608 = vpop.f32.mrf.mxu0
      %v609 = vadd.f32 %v421, %v608
      %610 = vmatmul.f32.gmra.mxu0 %v495
      %v611 = vpop.f32.mrf.mxu0
      %v612 = vadd.f32 %v421, %v611
      %613 = vmatmul.f32.gmra.mxu0 %v498
      %v614 = vpop.f32.mrf.mxu0
      %v615 = vadd.f32 %v421, %v614
      %616 = vmatmul.f32.gmra.mxu0 %v501
      %v617 = vpop.f32.mrf.mxu0
      %v618 = vadd.f32 %v421, %v617
      %619 = vmatmul.f32.gmra.mxu0 %v504
      %v620 = vpop.f32.mrf.mxu0
      %v621 = vadd.f32 %v421, %v620
      %622 = vmatmul.f32.gmra.mxu0 %v507
      %v623 = vpop.f32.mrf.mxu0
      %v624 = vadd.f32 %v421, %v623
      %625 = vmatmul.f32.gmra.mxu0 %v510
      %v626 = vpop.f32.mrf.mxu0
      %v627 = vadd.f32 %v421, %v626
      %628 = vmatmul.f32.gmra.mxu0 %v513
      %v629 = vpop.f32.mrf.mxu0
      %v630 = vadd.f32 %v421, %v629
      %631 = vmatmul.f32.gmra.mxu0 %v516
      %v632 = vpop.f32.mrf.mxu0
      %v633 = vadd.f32 %v421, %v632
      %634 = vmatmul.f32.gmra.mxu0 %v519
      %v635 = vpop.f32.mrf.mxu0
      %v636 = vadd.f32 %v421, %v635
      %637 = vmatmul.f32.gmra.mxu0 %v522
      %v638 = vpop.f32.mrf.mxu0
      %v639 = vadd.f32 %v421, %v638
      %640 = vmatmul.f32.gmra.mxu0 %v525
      %v641 = vpop.f32.mrf.mxu0
      %v642 = vadd.f32 %v421, %v641
      %643 = vmatmul.f32.gmra.mxu0 %v528
      %v644 = vpop.f32.mrf.mxu0
      %v645 = vadd.f32 %v421, %v644
      %646 = vmatmul.f32.gmra.mxu0 %v531
      %v647 = vpop.f32.mrf.mxu0
      %v648 = vadd.f32 %v421, %v647
      %649 = vmatmul.f32.gmra.mxu0 %v534
      %v650 = vpop.f32.mrf.mxu0
      %v651 = vadd.f32 %v421, %v650
      %652 = vmatmul.f32.gmra.mxu0 %v537
      %v653 = vpop.f32.mrf.mxu0
      %v654 = vadd.f32 %v421, %v653
      %655 = vmatmul.f32.gmra.mxu0 %v540
      %v656 = vpop.f32.mrf.mxu0
      %v657 = vadd.f32 %v421, %v656
      %658 = vmatmul.f32.gmra.mxu0 %v543
      %v659 = vpop.f32.mrf.mxu0
      %v660 = vadd.f32 %v421, %v659
      %661 = vmatmul.f32.gmra.mxu0 %v546
      %v662 = vpop.f32.mrf.mxu0
      %v663 = vadd.f32 %v421, %v662
      %664 = vmatmul.f32.gmra.mxu0 %v549
      %v665 = vpop.f32.mrf.mxu0
      %v666 = vadd.f32 %v421, %v665
      %667 = vmatmul.f32.gmra.mxu0 %v552
      %v668 = vpop.f32.mrf.mxu0
      %v669 = vadd.f32 %v421, %v668
      %670 = vmatmul.f32.gmra.mxu0 %v555
      %v671 = vpop.f32.mrf.mxu0
      %v672 = vadd.f32 %v421, %v671
      %673 = vmatmul.f32.gmra.mxu0 %v558
      %v674 = vpop.f32.mrf.mxu0
      %v675 = vadd.f32 %v421, %v674
      %676 = vmatmul.f32.gmra.mxu0 %v561
      %v677 = vpop.f32.mrf.mxu0
      %v678 = vadd.f32 %v421, %v677
      %679 = vmatmul.f32.gmra.mxu0 %v564
      %v680 = vpop.f32.mrf.mxu0
      %v681 = vadd.f32 %v421, %v680
      %682 = vmatmul.f32.gmra.mxu0 %v567
      %v683 = vpop.f32.mrf.mxu0
      %v684 = vadd.f32 %v421, %v683
      %685 = vmatmul.f32.gmra.mxu0 %v570
      %v686 = vpop.f32.mrf.mxu0
      %v687 = vadd.f32 %v421, %v686
      %688 = vmatmul.f32.gmra.mxu0 %v573
      %v689 = vpop.f32.mrf.mxu0
      %v690 = vadd.f32 %v421, %v689
      %691 = vmatmul.f32.gmra.mxu0 %v576
      %v692 = vpop.f32.mrf.mxu0
      %v693 = vadd.f32 %v421, %v692
      %694 = vmatmul.f32.gmra.mxu0 %v579
      %v695 = vpop.f32.mrf.mxu0
      %v696 = vadd.f32 %v421, %v695
      %697 = vmatmul.f32.gmra.mxu0 %v582
      %v698 = vpop.f32.mrf.mxu0
      %v699 = vadd.f32 %v421, %v698
      %700 = vdwg.mxu0
      %v701 = vmax.f32 %v606, 0.0
      %v702 = vmax.f32 %v609, 0.0
      %v703 = vmax.f32 %v612, 0.0
      %v704 = vmax.f32 %v615, 0.0
      %v705 = vmax.f32 %v618, 0.0
      %v706 = vmax.f32 %v621, 0.0
      %v707 = vmax.f32 %v624, 0.0
      %v708 = vmax.f32 %v627, 0.0
      %v709 = vmax.f32 %v630, 0.0
      %v710 = vmax.f32 %v633, 0.0
      %v711 = vmax.f32 %v636, 0.0
      %v712 = vmax.f32 %v639, 0.0
      %v713 = vmax.f32 %v642, 0.0
      %v714 = vmax.f32 %v645, 0.0
      %v715 = vmax.f32 %v648, 0.0
      %v716 = vmax.f32 %v651, 0.0
      %v717 = vmax.f32 %v654, 0.0
      %v718 = vmax.f32 %v657, 0.0
      %v719 = vmax.f32 %v660, 0.0
      %v720 = vmax.f32 %v663, 0.0
      %v721 = vmax.f32 %v666, 0.0
      %v722 = vmax.f32 %v669, 0.0
      %v723 = vmax.f32 %v672, 0.0
      %v724 = vmax.f32 %v675, 0.0
      %v725 = vmax.f32 %v678, 0.0
      %v726 = vmax.f32 %v681, 0.0
      %v727 = vmax.f32 %v684, 0.0
      %v728 = vmax.f32 %v687, 0.0
      %v729 = vmax.f32 %v690, 0.0
      %v730 = vmax.f32 %v693, 0.0
      %v731 = vmax.f32 %v696, 0.0
      %v732 = vmax.f32 %v699, 0.0
      %vm733 = vcmask 254976
      %734 = vst.msk [vmem:[#allocation2] sm:$0x3] %vm733, 0.0
      %vm735 = vcmask 261120
      %736 = vst.msk [vmem:[#allocation2 + $0x2] sm:$0xff] %vm735, %v701
      %737 = vst.msk [vmem:[#allocation2 + $0xa] sm:$0xff] %vm735, %v702
      %738 = vst.msk [vmem:[#allocation2 + $0x12] sm:$0xff] %vm735, %v703
      %739 = vst.msk [vmem:[#allocation2 + $0x1a] sm:$0xff] %vm735, %v704
      %740 = vst.msk [vmem:[#allocation2 + $0x22] sm:$0xff] %vm735, %v705
      %741 = vst.msk [vmem:[#allocation2 + $0x2a] sm:$0xff] %vm735, %v706
      %742 = vst.msk [vmem:[#allocation2 + $0x32] sm:$0xff] %vm735, %v707
      %743 = vst.msk [vmem:[#allocation2 + $0x3a] sm:$0xff] %vm735, %v708
      %744 = vst.msk [vmem:[#allocation2 + $0x42] sm:$0xff] %vm735, %v709
      %745 = vst.msk [vmem:[#allocation2 + $0x4a] sm:$0xff] %vm735, %v710
      %746 = vst.msk [vmem:[#allocation2 + $0x52] sm:$0xff] %vm735, %v711
      %747 = vst.msk [vmem:[#allocation2 + $0x5a] sm:$0xff] %vm735, %v712
      %748 = vst.msk [vmem:[#allocation2 + $0x62] sm:$0xff] %vm735, %v713
      %749 = vst.msk [vmem:[#allocation2 + $0x6a] sm:$0xff] %vm735, %v714
      %750 = vst.msk [vmem:[#allocation2 + $0x72] sm:$0xff] %vm735, %v715
      %751 = vst.msk [vmem:[#allocation2 + $0x7a] sm:$0xff] %vm735, %v716
      %752 = vst.msk [vmem:[#allocation2 + $0x82] sm:$0xff] %vm735, %v717
      %753 = vst.msk [vmem:[#allocation2 + $0x8a] sm:$0xff] %vm735, %v718
      %754 = vst.msk [vmem:[#allocation2 + $0x92] sm:$0xff] %vm735, %v719
      %755 = vst.msk [vmem:[#allocation2 + $0x9a] sm:$0xff] %vm735, %v720
      %756 = vst.msk [vmem:[#allocation2 + $0xa2] sm:$0xff] %vm735, %v721
      %757 = vst.msk [vmem:[#allocation2 + $0xaa] sm:$0xff] %vm735, %v722
      %758 = vst.msk [vmem:[#allocation2 + $0xb2] sm:$0xff] %vm735, %v723
      %759 = vst.msk [vmem:[#allocation2 + $0xba] sm:$0xff] %vm735, %v724
      %760 = vst.msk [vmem:[#allocation2 + $0xc2] sm:$0xff] %vm735, %v725
      %761 = vst.msk [vmem:[#allocation2 + $0xca] sm:$0xff] %vm735, %v726
      %762 = vst.msk [vmem:[#allocation2 + $0xd2] sm:$0xff] %vm735, %v727
      %763 = vst.msk [vmem:[#allocation2 + $0xda] sm:$0xff] %vm735, %v728
      %764 = vst.msk [vmem:[#allocation2 + $0xe2] sm:$0xff] %vm735, %v729
      %765 = vst.msk [vmem:[#allocation2 + $0xea] sm:$0xff] %vm735, %v730
      %766 = vst.msk [vmem:[#allocation2 + $0xf2] sm:$0xff] %vm735, %v731
      %767 = vst.msk [vmem:[#allocation2 + $0xfa] sm:$0xff] %vm735, %v732
      %vm768 = vcmask 259072
      %769 = vst.msk [vmem:[#allocation2 + $0x102] sm:$0x3f] %vm768, 0.0
      %v770 = vld [vmem:[#allocation2] ss:$4 sm:$0xff]
      %s771 = scalar_lea.vmem [#allocation2], 32
      %v772 = vld [vmem:[%s771] ss:$4 sm:$0xff]
      %s773 = scalar_lea.vmem [#allocation2], 64
      %v774 = vld [vmem:[%s773] ss:$4 sm:$0xff]
      %s775 = scalar_lea.vmem [#allocation2], 96
      %v776 = vld [vmem:[%s775] ss:$4 sm:$0xff]
      %s777 = scalar_lea.vmem [#allocation2], 128
      %v778 = vld [vmem:[%s777] ss:$4 sm:$0xff]
      %s779 = scalar_lea.vmem [#allocation2], 160
      %v780 = vld [vmem:[%s779] ss:$4 sm:$0xff]
      %s781 = scalar_lea.vmem [#allocation2], 192
      %v782 = vld [vmem:[%s781] ss:$4 sm:$0xff]
      %s783 = scalar_lea.vmem [#allocation2], 224
      %v784 = vld [vmem:[%s783] ss:$4 sm:$0xff]
      %s785 = scalar_lea.vmem [#allocation2], 1
      %v786 = vld [vmem:[%s785] ss:$4 sm:$0xff]
      %s787 = scalar_lea.vmem [#allocation2], 33
      %v788 = vld [vmem:[%s787] ss:$4 sm:$0xff]
      %s789 = scalar_lea.vmem [#allocation2], 65
      %v790 = vld [vmem:[%s789] ss:$4 sm:$0xff]
      %s791 = scalar_lea.vmem [#allocation2], 97
      %v792 = vld [vmem:[%s791] ss:$4 sm:$0xff]
      %s793 = scalar_lea.vmem [#allocation2], 129
      %v794 = vld [vmem:[%s793] ss:$4 sm:$0xff]
      %s795 = scalar_lea.vmem [#allocation2], 161
      %v796 = vld [vmem:[%s795] ss:$4 sm:$0xff]
      %s797 = scalar_lea.vmem [#allocation2], 193
      %v798 = vld [vmem:[%s797] ss:$4 sm:$0xff]
      %s799 = scalar_lea.vmem [#allocation2], 225
      %v800 = vld [vmem:[%s799] ss:$4 sm:$0xff]
      %s801 = scalar_lea.vmem [#allocation2], 2
      %v802 = vld [vmem:[%s801] ss:$4 sm:$0xff]
      %s803 = scalar_lea.vmem [#allocation2], 34
      %v804 = vld [vmem:[%s803] ss:$4 sm:$0xff]
      %s805 = scalar_lea.vmem [#allocation2], 66
      %v806 = vld [vmem:[%s805] ss:$4 sm:$0xff]
      %s807 = scalar_lea.vmem [#allocation2], 98
      %v808 = vld [vmem:[%s807] ss:$4 sm:$0xff]
      %s809 = scalar_lea.vmem [#allocation2], 130
      %v810 = vld [vmem:[%s809] ss:$4 sm:$0xff]
      %s811 = scalar_lea.vmem [#allocation2], 162
      %v812 = vld [vmem:[%s811] ss:$4 sm:$0xff]
      %s813 = scalar_lea.vmem [#allocation2], 194
      %v814 = vld [vmem:[%s813] ss:$4 sm:$0xff]
      %s815 = scalar_lea.vmem [#allocation2], 226
      %v816 = vld [vmem:[%s815] ss:$4 sm:$0xff]
      %s817 = scalar_lea.vmem [#allocation2], 3
      %v818 = vld [vmem:[%s817] ss:$4 sm:$0xff]
      %s819 = scalar_lea.vmem [#allocation2], 35
      %v820 = vld [vmem:[%s819] ss:$4 sm:$0xff]
      %s821 = scalar_lea.vmem [#allocation2], 67
      %v822 = vld [vmem:[%s821] ss:$4 sm:$0xff]
      %s823 = scalar_lea.vmem [#allocation2], 99
      %v824 = vld [vmem:[%s823] ss:$4 sm:$0xff]
      %s825 = scalar_lea.vmem [#allocation2], 131
      %v826 = vld [vmem:[%s825] ss:$4 sm:$0xff]
      %s827 = scalar_lea.vmem [#allocation2], 163
      %v828 = vld [vmem:[%s827] ss:$4 sm:$0xff]
      %s829 = scalar_lea.vmem [#allocation2], 195
      %v830 = vld [vmem:[%s829] ss:$4 sm:$0xff]
      %s831 = scalar_lea.vmem [#allocation2], 227
      %v832 = vld [vmem:[%s831] ss:$4 sm:$0xff]
      %s833 = scalar_lea.vmem [#allocation2], 4
      %v834 = vld [vmem:[%s833] ss:$4 sm:$0xff]
      %s835 = scalar_lea.vmem [#allocation2], 36
      %v836 = vld [vmem:[%s835] ss:$4 sm:$0xff]
      %s837 = scalar_lea.vmem [#allocation2], 68
      %v838 = vld [vmem:[%s837] ss:$4 sm:$0xff]
      %s839 = scalar_lea.vmem [#allocation2], 100
      %v840 = vld [vmem:[%s839] ss:$4 sm:$0xff]
      %s841 = scalar_lea.vmem [#allocation2], 132
      %v842 = vld [vmem:[%s841] ss:$4 sm:$0xff]
      %s843 = scalar_lea.vmem [#allocation2], 164
      %v844 = vld [vmem:[%s843] ss:$4 sm:$0xff]
      %s845 = scalar_lea.vmem [#allocation2], 196
      %v846 = vld [vmem:[%s845] ss:$4 sm:$0xff]
      %s847 = scalar_lea.vmem [#allocation2], 228
      %v848 = vld [vmem:[%s847] ss:$4 sm:$0xff]
      %857 = vrot.lane.b32.xlu0 %v786, 32
      %v858 = vpop.permute.xlu0 %857
      %859 = vrot.lane.b32.xlu0 %v788, 32
      %v860 = vpop.permute.xlu0 %859
      %861 = vrot.lane.b32.xlu0 %v790, 32
      %v862 = vpop.permute.xlu0 %861
      %863 = vrot.lane.b32.xlu0 %v792, 32
      %v864 = vpop.permute.xlu0 %863
      %865 = vrot.lane.b32.xlu0 %v794, 32
      %v866 = vpop.permute.xlu0 %865
      %867 = vrot.lane.b32.xlu0 %v796, 32
      %v868 = vpop.permute.xlu0 %867
      %869 = vrot.lane.b32.xlu0 %v798, 32
      %v870 = vpop.permute.xlu0 %869
      %871 = vrot.lane.b32.xlu0 %v800, 32
      %v872 = vpop.permute.xlu0 %871
      %889 = vrot.lane.b32.xlu0 %v802, 64
      %v890 = vpop.permute.xlu0 %889
      %891 = vrot.lane.b32.xlu0 %v804, 64
      %v892 = vpop.permute.xlu0 %891
      %893 = vrot.lane.b32.xlu0 %v806, 64
      %v894 = vpop.permute.xlu0 %893
      %895 = vrot.lane.b32.xlu0 %v808, 64
      %v896 = vpop.permute.xlu0 %895
      %897 = vrot.lane.b32.xlu0 %v810, 64
      %v898 = vpop.permute.xlu0 %897
      %899 = vrot.lane.b32.xlu0 %v812, 64
      %v900 = vpop.permute.xlu0 %899
      %901 = vrot.lane.b32.xlu0 %v814, 64
      %v902 = vpop.permute.xlu0 %901
      %903 = vrot.lane.b32.xlu0 %v816, 64
      %v904 = vpop.permute.xlu0 %903
      %921 = vrot.lane.b32.xlu0 %v818, 96
      %v922 = vpop.permute.xlu0 %921
      %923 = vrot.lane.b32.xlu0 %v820, 96
      %v924 = vpop.permute.xlu0 %923
      %925 = vrot.lane.b32.xlu0 %v822, 96
      %v926 = vpop.permute.xlu0 %925
      %927 = vrot.lane.b32.xlu0 %v824, 96
      %v928 = vpop.permute.xlu0 %927
      %929 = vrot.lane.b32.xlu0 %v826, 96
      %v930 = vpop.permute.xlu0 %929
      %931 = vrot.lane.b32.xlu0 %v828, 96
      %v932 = vpop.permute.xlu0 %931
      %933 = vrot.lane.b32.xlu0 %v830, 96
      %v934 = vpop.permute.xlu0 %933
      %935 = vrot.lane.b32.xlu0 %v832, 96
      %v936 = vpop.permute.xlu0 %935
      %v945 = vsel %vm735, %v770, %v858
      %v946 = vsel %vm735, %v772, %v860
      %v947 = vsel %vm735, %v774, %v862
      %v948 = vsel %vm735, %v776, %v864
      %v949 = vsel %vm735, %v778, %v866
      %v950 = vsel %vm735, %v780, %v868
      %v951 = vsel %vm735, %v782, %v870
      %v952 = vsel %vm735, %v784, %v872
      %vm953 = vcmask 523264
      %v954 = vsel %vm953, %v945, %v890
      %v955 = vsel %vm953, %v946, %v892
      %v956 = vsel %vm953, %v947, %v894
      %v957 = vsel %vm953, %v948, %v896
      %v958 = vsel %vm953, %v949, %v898
      %v959 = vsel %vm953, %v950, %v900
      %v960 = vsel %vm953, %v951, %v902
      %v961 = vsel %vm953, %v952, %v904
      %vm962 = vcmask 785408
      %v963 = vsel %vm962, %v954, %v922
      %v964 = vsel %vm962, %v955, %v924
      %v965 = vsel %vm962, %v956, %v926
      %v966 = vsel %vm962, %v957, %v928
      %v967 = vsel %vm962, %v958, %v930
      %v968 = vsel %vm962, %v959, %v932
      %v969 = vsel %vm962, %v960, %v934
      %v970 = vsel %vm962, %v961, %v936
      %v971 = vld [vmem:[%s4] sm:$0xff]
      %v972 = vld [vmem:[%s4 + $0x8] sm:$0xff]
      %v973 = vld [vmem:[%s4 + $0x10] sm:$0xff]
      %v974 = vld [vmem:[%s4 + $0x18] sm:$0xff]
      %v975 = vld [vmem:[%s4 + $0x20] sm:$0xff]
      %v976 = vld [vmem:[%s4 + $0x28] sm:$0xff]
      %v977 = vld [vmem:[%s4 + $0x30] sm:$0xff]
      %v978 = vld [vmem:[%s4 + $0x38] sm:$0xff]
      %v979 = vld [vmem:[%s4 + $0x40] sm:$0xff]
      %v980 = vld [vmem:[%s4 + $0x48] sm:$0xff]
      %v981 = vld [vmem:[%s4 + $0x50] sm:$0xff]
      %v982 = vld [vmem:[%s4 + $0x58] sm:$0xff]
      %v983 = vld [vmem:[%s4 + $0x60] sm:$0xff]
      %v984 = vld [vmem:[%s4 + $0x68] sm:$0xff]
      %v985 = vld [vmem:[%s4 + $0x70] sm:$0xff]
      %v986 = vld [vmem:[%s4 + $0x78] sm:$0xff]
      %v987 = vld [vmem:[%s4 + $0x80] sm:$0xff]
      %v988 = vld [vmem:[%s4 + $0x88] sm:$0xff]
      %v989 = vld [vmem:[%s4 + $0x90] sm:$0xff]
      %v990 = vld [vmem:[%s4 + $0x98] sm:$0xff]
      %v991 = vld [vmem:[%s5] sm:$0x1]
      %v993 = vperm.slane %v991, 0
      %v996 = vsel %vm735, %v834, 0
      %v999 = vsel %vm735, %v836, 0
      %v1002 = vsel %vm735, %v838, 0
      %v1005 = vsel %vm735, %v840, 0
      %v1008 = vsel %vm735, %v842, 0
      %v1011 = vsel %vm735, %v844, 0
      %v1014 = vsel %vm735, %v846, 0
      %v1017 = vsel %vm735, %v848, 0
      %1019 = vmatpush.msra.mxu0 %v986
      %1020 = vmatpush.msra.mxu0 %v985
      %1021 = vmatpush.msra.mxu0 %v984
      %1022 = vmatpush.msra.mxu0 %v983
      %1023 = vmatpush.msra.mxu0 %v982
      %1024 = vmatpush.msra.mxu0 %v981
      %1025 = vmatpush.msra.mxu0 %v980
      %1026 = vmatpush.msra.mxu0 %v979
      %1027 = vmatpush.msra.mxu0 %v978
      %1028 = vmatpush.msra.mxu0 %v977
      %1029 = vmatpush.msra.mxu0 %v976
      %1030 = vmatpush.msra.mxu0 %v975
      %1031 = vmatpush.msra.mxu0 %v974
      %1032 = vmatpush.msra.mxu0 %v973
      %1033 = vmatpush.msra.mxu0 %v972
      %1034 = vmatpush.msra.mxu0 %v971
      %1035 = vmatmul.f32.gmra.mxu0 %v963
      %v1036 = vpop.f32.mrf.mxu0
      %v1037 = vadd.f32 %v993, %v1036
      %1038 = vmatmul.f32.gmra.mxu0 %v964
      %v1039 = vpop.f32.mrf.mxu0
      %v1040 = vadd.f32 %v993, %v1039
      %1041 = vmatmul.f32.gmra.mxu0 %v965
      %v1042 = vpop.f32.mrf.mxu0
      %v1043 = vadd.f32 %v993, %v1042
      %1044 = vmatmul.f32.gmra.mxu0 %v966
      %v1045 = vpop.f32.mrf.mxu0
      %v1046 = vadd.f32 %v993, %v1045
      %1047 = vmatmul.f32.gmra.mxu0 %v967
      %v1048 = vpop.f32.mrf.mxu0
      %v1049 = vadd.f32 %v993, %v1048
      %1050 = vmatmul.f32.gmra.mxu0 %v968
      %v1051 = vpop.f32.mrf.mxu0
      %v1052 = vadd.f32 %v993, %v1051
      %1053 = vmatmul.f32.gmra.mxu0 %v969
      %v1054 = vpop.f32.mrf.mxu0
      %v1055 = vadd.f32 %v993, %v1054
      %1056 = vmatmul.f32.gmra.mxu0 %v970
      %v1057 = vpop.f32.mrf.mxu0
      %v1058 = vadd.f32 %v993, %v1057
      %1059 = vdwg.mxu0
      %1060 = vmatpush.msra.mxu0 0.0
      %1061 = vmatpush.msra.mxu0 0.0
      %1062 = vmatpush.msra.mxu0 0.0
      %1063 = vmatpush.msra.mxu0 0.0
      %1064 = vmatpush.msra.mxu0 0.0
      %1065 = vmatpush.msra.mxu0 0.0
      %1066 = vmatpush.msra.mxu0 0.0
      %1067 = vmatpush.msra.mxu0 0.0
      %1068 = vmatpush.msra.mxu0 0.0
      %1069 = vmatpush.msra.mxu0 0.0
      %1070 = vmatpush.msra.mxu0 0.0
      %1071 = vmatpush.msra.mxu0 0.0
      %1072 = vmatpush.msra.mxu0 %v990
      %1073 = vmatpush.msra.mxu0 %v989
      %1074 = vmatpush.msra.mxu0 %v988
      %1075 = vmatpush.msra.mxu0 %v987
      %1076 = vmatmul.f32.gmra.mxu0 %v996
      %v1077 = vpop.f32.mrf.mxu0
      %v1078 = vadd.f32 %v1037, %v1077
      %1079 = vmatmul.f32.gmra.mxu0 %v999
      %v1080 = vpop.f32.mrf.mxu0
      %v1081 = vadd.f32 %v1040, %v1080
      %1082 = vmatmul.f32.gmra.mxu0 %v1002
      %v1083 = vpop.f32.mrf.mxu0
      %v1084 = vadd.f32 %v1043, %v1083
      %1085 = vmatmul.f32.gmra.mxu0 %v1005
      %v1086 = vpop.f32.mrf.mxu0
      %v1087 = vadd.f32 %v1046, %v1086
      %1088 = vmatmul.f32.gmra.mxu0 %v1008
      %v1089 = vpop.f32.mrf.mxu0
      %v1090 = vadd.f32 %v1049, %v1089
      %1091 = vmatmul.f32.gmra.mxu0 %v1011
      %v1092 = vpop.f32.mrf.mxu0
      %v1093 = vadd.f32 %v1052, %v1092
      %1094 = vmatmul.f32.gmra.mxu0 %v1014
      %v1095 = vpop.f32.mrf.mxu0
      %v1096 = vadd.f32 %v1055, %v1095
      %1097 = vmatmul.f32.gmra.mxu0 %v1017
      %v1098 = vpop.f32.mrf.mxu0
      %v1099 = vadd.f32 %v1058, %v1098
      %1100 = vdwg.mxu0
      %v1101 = vmax.f32 %v1078, 0.0
      %v1102 = vmax.f32 %v1081, 0.0
      %v1103 = vmax.f32 %v1084, 0.0
      %v1104 = vmax.f32 %v1087, 0.0
      %v1105 = vmax.f32 %v1090, 0.0
      %v1106 = vmax.f32 %v1093, 0.0
      %v1107 = vmax.f32 %v1096, 0.0
      %v1108 = vmax.f32 %v1099, 0.0
      %vm1109 = vcmask 516096
      %1110 = vst.msk [vmem:[#allocation3] sm:$0x1] %vm1109, 0.0
      %1111 = vst.msk [vmem:[#allocation3 + $0x1] sm:$0xff] %vm953, %v1101
      %1112 = vst.msk [vmem:[#allocation3 + $0x9] sm:$0xff] %vm953, %v1102
      %1113 = vst.msk [vmem:[#allocation3 + $0x11] sm:$0xff] %vm953, %v1103
      %1114 = vst.msk [vmem:[#allocation3 + $0x19] sm:$0xff] %vm953, %v1104
      %1115 = vst.msk [vmem:[#allocation3 + $0x21] sm:$0xff] %vm953, %v1105
      %1116 = vst.msk [vmem:[#allocation3 + $0x29] sm:$0xff] %vm953, %v1106
      %1117 = vst.msk [vmem:[#allocation3 + $0x31] sm:$0xff] %vm953, %v1107
      %1118 = vst.msk [vmem:[#allocation3 + $0x39] sm:$0xff] %vm953, %v1108
      %vm1119 = vcmask 522240
      %1120 = vst.msk [vmem:[#allocation3 + $0x41] sm:$0x7f] %vm1119, 0.0
      %v1121 = vld [vmem:[#allocation3] ss:$4 sm:$0xff]
      %s1122 = scalar_lea.vmem [#allocation3], 32
      %v1123 = vld [vmem:[%s1122] ss:$4 sm:$0xff]
      %s1124 = scalar_lea.vmem [#allocation3], 1
      %v1125 = vld [vmem:[%s1124] ss:$4 sm:$0xff]
      %s1126 = scalar_lea.vmem [#allocation3], 33
      %v1127 = vld [vmem:[%s1126] ss:$4 sm:$0xff]
      %s1128 = scalar_lea.vmem [#allocation3], 2
      %v1129 = vld [vmem:[%s1128] ss:$4 sm:$0xff]
      %s1130 = scalar_lea.vmem [#allocation3], 34
      %v1131 = vld [vmem:[%s1130] ss:$4 sm:$0xff]
      %1134 = vrot.lane.b32.xlu0 %v1125, 64
      %v1135 = vpop.permute.xlu0 %1134
      %1136 = vrot.lane.b32.xlu0 %v1127, 64
      %v1137 = vpop.permute.xlu0 %1136
      %v1140 = vsel %vm953, %v1121, %v1135
      %v1141 = vsel %vm953, %v1123, %v1137
      %v1142 = vld [vmem:[%s6] sm:$0xff]
      %v1143 = vld [vmem:[%s6 + $0x8] sm:$0xff]
      %v1144 = vld [vmem:[%s6 + $0x10] sm:$0xff]
      %v1145 = vld [vmem:[%s6 + $0x18] sm:$0xff]
      %v1146 = vld [vmem:[%s6 + $0x20] sm:$0xff]
      %v1147 = vld [vmem:[%s6 + $0x28] sm:$0xff]
      %v1148 = vld [vmem:[%s6 + $0x30] sm:$0xff]
      %v1149 = vld [vmem:[%s6 + $0x38] sm:$0xff]
      %v1150 = vld [vmem:[%s6 + $0x40] sm:$0xff]
      %v1151 = vld [vmem:[%s6 + $0x48] sm:$0xff]
      %v1152 = vld [vmem:[%s6 + $0x50] sm:$0xff]
      %v1153 = vld [vmem:[%s6 + $0x58] sm:$0xff]
      %v1154 = vld [vmem:[%s6 + $0x60] sm:$0xff]
      %v1155 = vld [vmem:[%s6 + $0x68] sm:$0xff]
      %v1156 = vld [vmem:[%s6 + $0x70] sm:$0xff]
      %v1157 = vld [vmem:[%s6 + $0x78] sm:$0xff]
      %v1158 = vld [vmem:[%s6 + $0x80] sm:$0xff]
      %v1159 = vld [vmem:[%s6 + $0x88] sm:$0xff]
      %v1160 = vld [vmem:[%s6 + $0x90] sm:$0xff]
      %v1161 = vld [vmem:[%s6 + $0x98] sm:$0xff]
      %v1162 = vld [vmem:[%s6 + $0xa0] sm:$0xff]
      %v1163 = vld [vmem:[%s6 + $0xa8] sm:$0xff]
      %v1164 = vld [vmem:[%s6 + $0xb0] sm:$0xff]
      %v1165 = vld [vmem:[%s6 + $0xb8] sm:$0xff]
      %v1166 = vld [vmem:[%s7] sm:$0x1]
      %v1168 = vperm.slane %v1166, 0
      %v1171 = vsel %vm953, %v1129, 0
      %v1174 = vsel %vm953, %v1131, 0
      %1176 = vmatpush.msra.mxu0 %v1157
      %1177 = vmatpush.msra.mxu0 %v1156
      %1178 = vmatpush.msra.mxu0 %v1155
      %1179 = vmatpush.msra.mxu0 %v1154
      %1180 = vmatpush.msra.mxu0 %v1153
      %1181 = vmatpush.msra.mxu0 %v1152
      %1182 = vmatpush.msra.mxu0 %v1151
      %1183 = vmatpush.msra.mxu0 %v1150
      %1184 = vmatpush.msra.mxu0 %v1149
      %1185 = vmatpush.msra.mxu0 %v1148
      %1186 = vmatpush.msra.mxu0 %v1147
      %1187 = vmatpush.msra.mxu0 %v1146
      %1188 = vmatpush.msra.mxu0 %v1145
      %1189 = vmatpush.msra.mxu0 %v1144
      %1190 = vmatpush.msra.mxu0 %v1143
      %1191 = vmatpush.msra.mxu0 %v1142
      %1192 = vmatmul.f32.gmra.mxu0 %v1140
      %v1193 = vpop.f32.mrf.mxu0
      %v1194 = vadd.f32 %v1168, %v1193
      %1195 = vmatmul.f32.gmra.mxu0 %v1141
      %v1196 = vpop.f32.mrf.mxu0
      %v1197 = vadd.f32 %v1168, %v1196
      %1198 = vdwg.mxu0
      %1199 = vmatpush.msra.mxu0 0.0
      %1200 = vmatpush.msra.mxu0 0.0
      %1201 = vmatpush.msra.mxu0 0.0
      %1202 = vmatpush.msra.mxu0 0.0
      %1203 = vmatpush.msra.mxu0 0.0
      %1204 = vmatpush.msra.mxu0 0.0
      %1205 = vmatpush.msra.mxu0 0.0
      %1206 = vmatpush.msra.mxu0 0.0
      %1207 = vmatpush.msra.mxu0 %v1165
      %1208 = vmatpush.msra.mxu0 %v1164
      %1209 = vmatpush.msra.mxu0 %v1163
      %1210 = vmatpush.msra.mxu0 %v1162
      %1211 = vmatpush.msra.mxu0 %v1161
      %1212 = vmatpush.msra.mxu0 %v1160
      %1213 = vmatpush.msra.mxu0 %v1159
      %1214 = vmatpush.msra.mxu0 %v1158
      %1215 = vmatmul.f32.gmra.mxu0 %v1171
      %v1216 = vpop.f32.mrf.mxu0
      %v1217 = vadd.f32 %v1194, %v1216
      %1218 = vmatmul.f32.gmra.mxu0 %v1174
      %v1219 = vpop.f32.mrf.mxu0
      %v1220 = vadd.f32 %v1197, %v1219
      %1221 = vdwg.mxu0
      %v1222 = vmax.f32 %v1217, 0.0
      %v1223 = vmax.f32 %v1220, 0.0
      %v1224 = vld [vmem:[%s407] sm:$0x1f]
      %v1225 = vld [vmem:[%s407 + $0x8] sm:$0x1f]
      %v1226 = vld [vmem:[%s2] sm:$0x1f]
      %v1227 = vld [vmem:[%s3] sm:$0x1]
      %v1229 = vperm.slane %v1227, 0
      %1231 = vxpose.xlu0.b32.start [1/16] %v1224, 128
      %1232 = vxpose.xlu0.b32.cont [2/16] 0.0, 128
      %1233 = vxpose.xlu0.b32.cont [3/16] 0.0, 128
      %1234 = vxpose.xlu0.b32.cont [4/16] 0.0, 128
      %1235 = vxpose.xlu0.b32.cont [5/16] 0.0, 128
      %1236 = vxpose.xlu0.b32.cont [6/16] 0.0, 128
      %1237 = vxpose.xlu0.b32.cont [7/16] 0.0, 128
      %1238 = vxpose.xlu0.b32.cont [8/16] 0.0, 128
      %1239 = vxpose.xlu0.b32.cont [9/16] 0.0, 128
      %1240 = vxpose.xlu0.b32.cont [10/16] 0.0, 128
      %1241 = vxpose.xlu0.b32.cont [11/16] 0.0, 128
      %1242 = vxpose.xlu0.b32.cont [12/16] 0.0, 128
      %1243 = vxpose.xlu0.b32.cont [13/16] 0.0, 128
      %1244 = vxpose.xlu0.b32.cont [14/16] 0.0, 128
      %1245 = vxpose.xlu0.b32.cont [15/16] 0.0, 128
      %1246 = vxpose.xlu0.b32.end [16/16] 0.0, 128
      %v1247 = vpop.trf.xlu0
      %v1248 = vpop.trf.xlu0
      %v1249 = vpop.trf.xlu0
      %v1250 = vpop.trf.xlu0
      %v1251 = vpop.trf.xlu0
      %v1252 = vpop.trf.xlu0
      %v1253 = vpop.trf.xlu0
      %v1254 = vpop.trf.xlu0
      %v1255 = vpop.trf.xlu0
      %v1256 = vpop.trf.xlu0
      %v1257 = vpop.trf.xlu0
      %v1258 = vpop.trf.xlu0
      %v1259 = vpop.trf.xlu0
      %v1260 = vpop.trf.xlu0
      %v1261 = vpop.trf.xlu0
      %v1262 = vpop.trf.xlu0
      %1263 = vxpose.xlu0.b32.start [1/16] %v1225, 128
      %1264 = vxpose.xlu0.b32.cont [2/16] 0.0, 128
      %1265 = vxpose.xlu0.b32.cont [3/16] 0.0, 128
      %1266 = vxpose.xlu0.b32.cont [4/16] 0.0, 128
      %1267 = vxpose.xlu0.b32.cont [5/16] 0.0, 128
      %1268 = vxpose.xlu0.b32.cont [6/16] 0.0, 128
      %1269 = vxpose.xlu0.b32.cont [7/16] 0.0, 128
      %1270 = vxpose.xlu0.b32.cont [8/16] 0.0, 128
      %1271 = vxpose.xlu0.b32.cont [9/16] 0.0, 128
      %1272 = vxpose.xlu0.b32.cont [10/16] 0.0, 128
      %1273 = vxpose.xlu0.b32.cont [11/16] 0.0, 128
      %1274 = vxpose.xlu0.b32.cont [12/16] 0.0, 128
      %1275 = vxpose.xlu0.b32.cont [13/16] 0.0, 128
      %1276 = vxpose.xlu0.b32.cont [14/16] 0.0, 128
      %1277 = vxpose.xlu0.b32.cont [15/16] 0.0, 128
      %1278 = vxpose.xlu0.b32.end [16/16] 0.0, 128
      %v1279 = vpop.trf.xlu0
      %v1280 = vpop.trf.xlu0
      %v1281 = vpop.trf.xlu0
      %v1282 = vpop.trf.xlu0
      %v1283 = vpop.trf.xlu0
      %v1284 = vpop.trf.xlu0
      %v1285 = vpop.trf.xlu0
      %v1286 = vpop.trf.xlu0
      %v1287 = vpop.trf.xlu0
      %v1288 = vpop.trf.xlu0
      %v1289 = vpop.trf.xlu0
      %v1290 = vpop.trf.xlu0
      %v1291 = vpop.trf.xlu0
      %v1292 = vpop.trf.xlu0
      %v1293 = vpop.trf.xlu0
      %v1294 = vpop.trf.xlu0
      %v1296 = vsel %vm487, %v1247, 0
      %v1299 = vsel %vm487, %v1248, 0
      %v1302 = vsel %vm487, %v1249, 0
      %v1305 = vsel %vm487, %v1250, 0
      %v1308 = vsel %vm487, %v1251, 0
      %v1311 = vsel %vm487, %v1252, 0
      %v1314 = vsel %vm487, %v1253, 0
      %v1317 = vsel %vm487, %v1254, 0
      %v1320 = vsel %vm487, %v1255, 0
      %v1323 = vsel %vm487, %v1256, 0
      %v1326 = vsel %vm487, %v1257, 0
      %v1329 = vsel %vm487, %v1258, 0
      %v1332 = vsel %vm487, %v1259, 0
      %v1335 = vsel %vm487, %v1260, 0
      %v1338 = vsel %vm487, %v1261, 0
      %v1341 = vsel %vm487, %v1262, 0
      %v1344 = vsel %vm487, %v1279, 0
      %v1347 = vsel %vm487, %v1280, 0
      %v1350 = vsel %vm487, %v1281, 0
      %v1353 = vsel %vm487, %v1282, 0
      %v1356 = vsel %vm487, %v1283, 0
      %v1359 = vsel %vm487, %v1284, 0
      %v1362 = vsel %vm487, %v1285, 0
      %v1365 = vsel %vm487, %v1286, 0
      %v1368 = vsel %vm487, %v1287, 0
      %v1371 = vsel %vm487, %v1288, 0
      %v1374 = vsel %vm487, %v1289, 0
      %v1377 = vsel %vm487, %v1290, 0
      %v1380 = vsel %vm487, %v1291, 0
      %v1383 = vsel %vm487, %v1292, 0
      %v1386 = vsel %vm487, %v1293, 0
      %v1389 = vsel %vm487, %v1294, 0
      %v1392 = vsel %vm584, %v1226, 0
      %1394 = vmatpush.msra.mxu0 0.0
      %1395 = vmatpush.msra.mxu0 0.0
      %1396 = vmatpush.msra.mxu0 0.0
      %1397 = vmatpush.msra.mxu0 0.0
      %1398 = vmatpush.msra.mxu0 0.0
      %1399 = vmatpush.msra.mxu0 0.0
      %1400 = vmatpush.msra.mxu0 0.0
      %1401 = vmatpush.msra.mxu0 0.0
      %1402 = vmatpush.msra.mxu0 0.0
      %1403 = vmatpush.msra.mxu0 0.0
      %1404 = vmatpush.msra.mxu0 0.0
      %1405 = vmatpush.msra.mxu0 0.0
      %1406 = vmatpush.msra.mxu0 0.0
      %1407 = vmatpush.msra.mxu0 0.0
      %1408 = vmatpush.msra.mxu0 0.0
      %1409 = vmatpush.msra.mxu0 %v1392
      %1410 = vmatmul.f32.gmra.mxu0 %v1296
      %v1411 = vpop.f32.mrf.mxu0
      %v1412 = vadd.f32 %v1229, %v1411
      %1413 = vmatmul.f32.gmra.mxu0 %v1299
      %v1414 = vpop.f32.mrf.mxu0
      %v1415 = vadd.f32 %v1229, %v1414
      %1416 = vmatmul.f32.gmra.mxu0 %v1302
      %v1417 = vpop.f32.mrf.mxu0
      %v1418 = vadd.f32 %v1229, %v1417
      %1419 = vmatmul.f32.gmra.mxu0 %v1305
      %v1420 = vpop.f32.mrf.mxu0
      %v1421 = vadd.f32 %v1229, %v1420
      %1422 = vmatmul.f32.gmra.mxu0 %v1308
      %v1423 = vpop.f32.mrf.mxu0
      %v1424 = vadd.f32 %v1229, %v1423
      %1425 = vmatmul.f32.gmra.mxu0 %v1311
      %v1426 = vpop.f32.mrf.mxu0
      %v1427 = vadd.f32 %v1229, %v1426
      %1428 = vmatmul.f32.gmra.mxu0 %v1314
      %v1429 = vpop.f32.mrf.mxu0
      %v1430 = vadd.f32 %v1229, %v1429
      %1431 = vmatmul.f32.gmra.mxu0 %v1317
      %v1432 = vpop.f32.mrf.mxu0
      %v1433 = vadd.f32 %v1229, %v1432
      %1434 = vmatmul.f32.gmra.mxu0 %v1320
      %v1435 = vpop.f32.mrf.mxu0
      %v1436 = vadd.f32 %v1229, %v1435
      %1437 = vmatmul.f32.gmra.mxu0 %v1323
      %v1438 = vpop.f32.mrf.mxu0
      %v1439 = vadd.f32 %v1229, %v1438
      %1440 = vmatmul.f32.gmra.mxu0 %v1326
      %v1441 = vpop.f32.mrf.mxu0
      %v1442 = vadd.f32 %v1229, %v1441
      %1443 = vmatmul.f32.gmra.mxu0 %v1329
      %v1444 = vpop.f32.mrf.mxu0
      %v1445 = vadd.f32 %v1229, %v1444
      %1446 = vmatmul.f32.gmra.mxu0 %v1332
      %v1447 = vpop.f32.mrf.mxu0
      %v1448 = vadd.f32 %v1229, %v1447
      %1449 = vmatmul.f32.gmra.mxu0 %v1335
      %v1450 = vpop.f32.mrf.mxu0
      %v1451 = vadd.f32 %v1229, %v1450
      %1452 = vmatmul.f32.gmra.mxu0 %v1338
      %v1453 = vpop.f32.mrf.mxu0
      %v1454 = vadd.f32 %v1229, %v1453
      %1455 = vmatmul.f32.gmra.mxu0 %v1341
      %v1456 = vpop.f32.mrf.mxu0
      %v1457 = vadd.f32 %v1229, %v1456
      %1458 = vmatmul.f32.gmra.mxu0 %v1344
      %v1459 = vpop.f32.mrf.mxu0
      %v1460 = vadd.f32 %v1229, %v1459
      %1461 = vmatmul.f32.gmra.mxu0 %v1347
      %v1462 = vpop.f32.mrf.mxu0
      %v1463 = vadd.f32 %v1229, %v1462
      %1464 = vmatmul.f32.gmra.mxu0 %v1350
      %v1465 = vpop.f32.mrf.mxu0
      %v1466 = vadd.f32 %v1229, %v1465
      %1467 = vmatmul.f32.gmra.mxu0 %v1353
      %v1468 = vpop.f32.mrf.mxu0
      %v1469 = vadd.f32 %v1229, %v1468
      %1470 = vmatmul.f32.gmra.mxu0 %v1356
      %v1471 = vpop.f32.mrf.mxu0
      %v1472 = vadd.f32 %v1229, %v1471
      %1473 = vmatmul.f32.gmra.mxu0 %v1359
      %v1474 = vpop.f32.mrf.mxu0
      %v1475 = vadd.f32 %v1229, %v1474
      %1476 = vmatmul.f32.gmra.mxu0 %v1362
      %v1477 = vpop.f32.mrf.mxu0
      %v1478 = vadd.f32 %v1229, %v1477
      %1479 = vmatmul.f32.gmra.mxu0 %v1365
      %v1480 = vpop.f32.mrf.mxu0
      %v1481 = vadd.f32 %v1229, %v1480
      %1482 = vmatmul.f32.gmra.mxu0 %v1368
      %v1483 = vpop.f32.mrf.mxu0
      %v1484 = vadd.f32 %v1229, %v1483
      %1485 = vmatmul.f32.gmra.mxu0 %v1371
      %v1486 = vpop.f32.mrf.mxu0
      %v1487 = vadd.f32 %v1229, %v1486
      %1488 = vmatmul.f32.gmra.mxu0 %v1374
      %v1489 = vpop.f32.mrf.mxu0
      %v1490 = vadd.f32 %v1229, %v1489
      %1491 = vmatmul.f32.gmra.mxu0 %v1377
      %v1492 = vpop.f32.mrf.mxu0
      %v1493 = vadd.f32 %v1229, %v1492
      %1494 = vmatmul.f32.gmra.mxu0 %v1380
      %v1495 = vpop.f32.mrf.mxu0
      %v1496 = vadd.f32 %v1229, %v1495
      %1497 = vmatmul.f32.gmra.mxu0 %v1383
      %v1498 = vpop.f32.mrf.mxu0
      %v1499 = vadd.f32 %v1229, %v1498
      %1500 = vmatmul.f32.gmra.mxu0 %v1386
      %v1501 = vpop.f32.mrf.mxu0
      %v1502 = vadd.f32 %v1229, %v1501
      %1503 = vmatmul.f32.gmra.mxu0 %v1389
      %v1504 = vpop.f32.mrf.mxu0
      %v1505 = vadd.f32 %v1229, %v1504
      %1506 = vdwg.mxu0
      %v1507 = vmax.f32 %v1412, 0.0
      %v1508 = vmax.f32 %v1415, 0.0
      %v1509 = vmax.f32 %v1418, 0.0
      %v1510 = vmax.f32 %v1421, 0.0
      %v1511 = vmax.f32 %v1424, 0.0
      %v1512 = vmax.f32 %v1427, 0.0
      %v1513 = vmax.f32 %v1430, 0.0
      %v1514 = vmax.f32 %v1433, 0.0
      %v1515 = vmax.f32 %v1436, 0.0
      %v1516 = vmax.f32 %v1439, 0.0
      %v1517 = vmax.f32 %v1442, 0.0
      %v1518 = vmax.f32 %v1445, 0.0
      %v1519 = vmax.f32 %v1448, 0.0
      %v1520 = vmax.f32 %v1451, 0.0
      %v1521 = vmax.f32 %v1454, 0.0
      %v1522 = vmax.f32 %v1457, 0.0
      %v1523 = vmax.f32 %v1460, 0.0
      %v1524 = vmax.f32 %v1463, 0.0
      %v1525 = vmax.f32 %v1466, 0.0
      %v1526 = vmax.f32 %v1469, 0.0
      %v1527 = vmax.f32 %v1472, 0.0
      %v1528 = vmax.f32 %v1475, 0.0
      %v1529 = vmax.f32 %v1478, 0.0
      %v1530 = vmax.f32 %v1481, 0.0
      %v1531 = vmax.f32 %v1484, 0.0
      %v1532 = vmax.f32 %v1487, 0.0
      %v1533 = vmax.f32 %v1490, 0.0
      %v1534 = vmax.f32 %v1493, 0.0
      %v1535 = vmax.f32 %v1496, 0.0
      %v1536 = vmax.f32 %v1499, 0.0
      %v1537 = vmax.f32 %v1502, 0.0
      %v1538 = vmax.f32 %v1505, 0.0
      %1539 = vst.msk [vmem:[#allocation2] sm:$0x3] %vm733, 0.0
      %1540 = vst.msk [vmem:[#allocation2 + $0x2] sm:$0xff] %vm735, %v1507
      %1541 = vst.msk [vmem:[#allocation2 + $0xa] sm:$0xff] %vm735, %v1508
      %1542 = vst.msk [vmem:[#allocation2 + $0x12] sm:$0xff] %vm735, %v1509
      %1543 = vst.msk [vmem:[#allocation2 + $0x1a] sm:$0xff] %vm735, %v1510
      %1544 = vst.msk [vmem:[#allocation2 + $0x22] sm:$0xff] %vm735, %v1511
      %1545 = vst.msk [vmem:[#allocation2 + $0x2a] sm:$0xff] %vm735, %v1512
      %1546 = vst.msk [vmem:[#allocation2 + $0x32] sm:$0xff] %vm735, %v1513
      %1547 = vst.msk [vmem:[#allocation2 + $0x3a] sm:$0xff] %vm735, %v1514
      %1548 = vst.msk [vmem:[#allocation2 + $0x42] sm:$0xff] %vm735, %v1515
      %1549 = vst.msk [vmem:[#allocation2 + $0x4a] sm:$0xff] %vm735, %v1516
      %1550 = vst.msk [vmem:[#allocation2 + $0x52] sm:$0xff] %vm735, %v1517
      %1551 = vst.msk [vmem:[#allocation2 + $0x5a] sm:$0xff] %vm735, %v1518
      %1552 = vst.msk [vmem:[#allocation2 + $0x62] sm:$0xff] %vm735, %v1519
      %1553 = vst.msk [vmem:[#allocation2 + $0x6a] sm:$0xff] %vm735, %v1520
      %1554 = vst.msk [vmem:[#allocation2 + $0x72] sm:$0xff] %vm735, %v1521
      %1555 = vst.msk [vmem:[#allocation2 + $0x7a] sm:$0xff] %vm735, %v1522
      %1556 = vst.msk [vmem:[#allocation2 + $0x82] sm:$0xff] %vm735, %v1523
      %1557 = vst.msk [vmem:[#allocation2 + $0x8a] sm:$0xff] %vm735, %v1524
      %1558 = vst.msk [vmem:[#allocation2 + $0x92] sm:$0xff] %vm735, %v1525
      %1559 = vst.msk [vmem:[#allocation2 + $0x9a] sm:$0xff] %vm735, %v1526
      %1560 = vst.msk [vmem:[#allocation2 + $0xa2] sm:$0xff] %vm735, %v1527
      %1561 = vst.msk [vmem:[#allocation2 + $0xaa] sm:$0xff] %vm735, %v1528
      %1562 = vst.msk [vmem:[#allocation2 + $0xb2] sm:$0xff] %vm735, %v1529
      %1563 = vst.msk [vmem:[#allocation2 + $0xba] sm:$0xff] %vm735, %v1530
      %1564 = vst.msk [vmem:[#allocation2 + $0xc2] sm:$0xff] %vm735, %v1531
      %1565 = vst.msk [vmem:[#allocation2 + $0xca] sm:$0xff] %vm735, %v1532
      %1566 = vst.msk [vmem:[#allocation2 + $0xd2] sm:$0xff] %vm735, %v1533
      %1567 = vst.msk [vmem:[#allocation2 + $0xda] sm:$0xff] %vm735, %v1534
      %1568 = vst.msk [vmem:[#allocation2 + $0xe2] sm:$0xff] %vm735, %v1535
      %1569 = vst.msk [vmem:[#allocation2 + $0xea] sm:$0xff] %vm735, %v1536
      %1570 = vst.msk [vmem:[#allocation2 + $0xf2] sm:$0xff] %vm735, %v1537
      %1571 = vst.msk [vmem:[#allocation2 + $0xfa] sm:$0xff] %vm735, %v1538
      %1572 = vst.msk [vmem:[#allocation2 + $0x102] sm:$0x3f] %vm768, 0.0
      %v1573 = vld [vmem:[#allocation2] ss:$4 sm:$0xff]
      %v1574 = vld [vmem:[%s771] ss:$4 sm:$0xff]
      %v1575 = vld [vmem:[%s773] ss:$4 sm:$0xff]
      %v1576 = vld [vmem:[%s775] ss:$4 sm:$0xff]
      %v1577 = vld [vmem:[%s777] ss:$4 sm:$0xff]
      %v1578 = vld [vmem:[%s779] ss:$4 sm:$0xff]
      %v1579 = vld [vmem:[%s781] ss:$4 sm:$0xff]
      %v1580 = vld [vmem:[%s783] ss:$4 sm:$0xff]
      %v1581 = vld [vmem:[%s785] ss:$4 sm:$0xff]
      %v1582 = vld [vmem:[%s787] ss:$4 sm:$0xff]
      %v1583 = vld [vmem:[%s789] ss:$4 sm:$0xff]
      %v1584 = vld [vmem:[%s791] ss:$4 sm:$0xff]
      %v1585 = vld [vmem:[%s793] ss:$4 sm:$0xff]
      %v1586 = vld [vmem:[%s795] ss:$4 sm:$0xff]
      %v1587 = vld [vmem:[%s797] ss:$4 sm:$0xff]
      %v1588 = vld [vmem:[%s799] ss:$4 sm:$0xff]
      %v1589 = vld [vmem:[%s801] ss:$4 sm:$0xff]
      %v1590 = vld [vmem:[%s803] ss:$4 sm:$0xff]
      %v1591 = vld [vmem:[%s805] ss:$4 sm:$0xff]
      %v1592 = vld [vmem:[%s807] ss:$4 sm:$0xff]
      %v1593 = vld [vmem:[%s809] ss:$4 sm:$0xff]
      %v1594 = vld [vmem:[%s811] ss:$4 sm:$0xff]
      %v1595 = vld [vmem:[%s813] ss:$4 sm:$0xff]
      %v1596 = vld [vmem:[%s815] ss:$4 sm:$0xff]
      %v1597 = vld [vmem:[%s817] ss:$4 sm:$0xff]
      %v1598 = vld [vmem:[%s819] ss:$4 sm:$0xff]
      %v1599 = vld [vmem:[%s821] ss:$4 sm:$0xff]
      %v1600 = vld [vmem:[%s823] ss:$4 sm:$0xff]
      %v1601 = vld [vmem:[%s825] ss:$4 sm:$0xff]
      %v1602 = vld [vmem:[%s827] ss:$4 sm:$0xff]
      %v1603 = vld [vmem:[%s829] ss:$4 sm:$0xff]
      %v1604 = vld [vmem:[%s831] ss:$4 sm:$0xff]
      %v1605 = vld [vmem:[%s833] ss:$4 sm:$0xff]
      %v1606 = vld [vmem:[%s835] ss:$4 sm:$0xff]
      %v1607 = vld [vmem:[%s837] ss:$4 sm:$0xff]
      %v1608 = vld [vmem:[%s839] ss:$4 sm:$0xff]
      %v1609 = vld [vmem:[%s841] ss:$4 sm:$0xff]
      %v1610 = vld [vmem:[%s843] ss:$4 sm:$0xff]
      %v1611 = vld [vmem:[%s845] ss:$4 sm:$0xff]
      %v1612 = vld [vmem:[%s847] ss:$4 sm:$0xff]
      %1621 = vrot.lane.b32.xlu0 %v1581, 32
      %v1622 = vpop.permute.xlu0 %1621
      %1623 = vrot.lane.b32.xlu0 %v1582, 32
      %v1624 = vpop.permute.xlu0 %1623
      %1625 = vrot.lane.b32.xlu0 %v1583, 32
      %v1626 = vpop.permute.xlu0 %1625
      %1627 = vrot.lane.b32.xlu0 %v1584, 32
      %v1628 = vpop.permute.xlu0 %1627
      %1629 = vrot.lane.b32.xlu0 %v1585, 32
      %v1630 = vpop.permute.xlu0 %1629
      %1631 = vrot.lane.b32.xlu0 %v1586, 32
      %v1632 = vpop.permute.xlu0 %1631
      %1633 = vrot.lane.b32.xlu0 %v1587, 32
      %v1634 = vpop.permute.xlu0 %1633
      %1635 = vrot.lane.b32.xlu0 %v1588, 32
      %v1636 = vpop.permute.xlu0 %1635
      %1653 = vrot.lane.b32.xlu0 %v1589, 64
      %v1654 = vpop.permute.xlu0 %1653
      %1655 = vrot.lane.b32.xlu0 %v1590, 64
      %v1656 = vpop.permute.xlu0 %1655
      %1657 = vrot.lane.b32.xlu0 %v1591, 64
      %v1658 = vpop.permute.xlu0 %1657
      %1659 = vrot.lane.b32.xlu0 %v1592, 64
      %v1660 = vpop.permute.xlu0 %1659
      %1661 = vrot.lane.b32.xlu0 %v1593, 64
      %v1662 = vpop.permute.xlu0 %1661
      %1663 = vrot.lane.b32.xlu0 %v1594, 64
      %v1664 = vpop.permute.xlu0 %1663
      %1665 = vrot.lane.b32.xlu0 %v1595, 64
      %v1666 = vpop.permute.xlu0 %1665
      %1667 = vrot.lane.b32.xlu0 %v1596, 64
      %v1668 = vpop.permute.xlu0 %1667
      %1685 = vrot.lane.b32.xlu0 %v1597, 96
      %v1686 = vpop.permute.xlu0 %1685
      %1687 = vrot.lane.b32.xlu0 %v1598, 96
      %v1688 = vpop.permute.xlu0 %1687
      %1689 = vrot.lane.b32.xlu0 %v1599, 96
      %v1690 = vpop.permute.xlu0 %1689
      %1691 = vrot.lane.b32.xlu0 %v1600, 96
      %v1692 = vpop.permute.xlu0 %1691
      %1693 = vrot.lane.b32.xlu0 %v1601, 96
      %v1694 = vpop.permute.xlu0 %1693
      %1695 = vrot.lane.b32.xlu0 %v1602, 96
      %v1696 = vpop.permute.xlu0 %1695
      %1697 = vrot.lane.b32.xlu0 %v1603, 96
      %v1698 = vpop.permute.xlu0 %1697
      %1699 = vrot.lane.b32.xlu0 %v1604, 96
      %v1700 = vpop.permute.xlu0 %1699
      %v1709 = vsel %vm735, %v1573, %v1622
      %v1710 = vsel %vm735, %v1574, %v1624
      %v1711 = vsel %vm735, %v1575, %v1626
      %v1712 = vsel %vm735, %v1576, %v1628
      %v1713 = vsel %vm735, %v1577, %v1630
      %v1714 = vsel %vm735, %v1578, %v1632
      %v1715 = vsel %vm735, %v1579, %v1634
      %v1716 = vsel %vm735, %v1580, %v1636
      %v1717 = vsel %vm953, %v1709, %v1654
      %v1718 = vsel %vm953, %v1710, %v1656
      %v1719 = vsel %vm953, %v1711, %v1658
      %v1720 = vsel %vm953, %v1712, %v1660
      %v1721 = vsel %vm953, %v1713, %v1662
      %v1722 = vsel %vm953, %v1714, %v1664
      %v1723 = vsel %vm953, %v1715, %v1666
      %v1724 = vsel %vm953, %v1716, %v1668
      %v1725 = vsel %vm962, %v1717, %v1686
      %v1726 = vsel %vm962, %v1718, %v1688
      %v1727 = vsel %vm962, %v1719, %v1690
      %v1728 = vsel %vm962, %v1720, %v1692
      %v1729 = vsel %vm962, %v1721, %v1694
      %v1730 = vsel %vm962, %v1722, %v1696
      %v1731 = vsel %vm962, %v1723, %v1698
      %v1732 = vsel %vm962, %v1724, %v1700
      %v1733 = vld [vmem:[%s4] sm:$0xff]
      %v1734 = vld [vmem:[%s4 + $0x8] sm:$0xff]
      %v1735 = vld [vmem:[%s4 + $0x10] sm:$0xff]
      %v1736 = vld [vmem:[%s4 + $0x18] sm:$0xff]
      %v1737 = vld [vmem:[%s4 + $0x20] sm:$0xff]
      %v1738 = vld [vmem:[%s4 + $0x28] sm:$0xff]
      %v1739 = vld [vmem:[%s4 + $0x30] sm:$0xff]
      %v1740 = vld [vmem:[%s4 + $0x38] sm:$0xff]
      %v1741 = vld [vmem:[%s4 + $0x40] sm:$0xff]
      %v1742 = vld [vmem:[%s4 + $0x48] sm:$0xff]
      %v1743 = vld [vmem:[%s4 + $0x50] sm:$0xff]
      %v1744 = vld [vmem:[%s4 + $0x58] sm:$0xff]
      %v1745 = vld [vmem:[%s4 + $0x60] sm:$0xff]
      %v1746 = vld [vmem:[%s4 + $0x68] sm:$0xff]
      %v1747 = vld [vmem:[%s4 + $0x70] sm:$0xff]
      %v1748 = vld [vmem:[%s4 + $0x78] sm:$0xff]
      %v1749 = vld [vmem:[%s4 + $0x80] sm:$0xff]
      %v1750 = vld [vmem:[%s4 + $0x88] sm:$0xff]
      %v1751 = vld [vmem:[%s4 + $0x90] sm:$0xff]
      %v1752 = vld [vmem:[%s4 + $0x98] sm:$0xff]
      %v1753 = vld [vmem:[%s5] sm:$0x1]
      %v1755 = vperm.slane %v1753, 0
      %v1758 = vsel %vm735, %v1605, 0
      %v1761 = vsel %vm735, %v1606, 0
      %v1764 = vsel %vm735, %v1607, 0
      %v1767 = vsel %vm735, %v1608, 0
      %v1770 = vsel %vm735, %v1609, 0
      %v1773 = vsel %vm735, %v1610, 0
      %v1776 = vsel %vm735, %v1611, 0
      %v1779 = vsel %vm735, %v1612, 0
      %1781 = vmatpush.msra.mxu0 %v1748
      %1782 = vmatpush.msra.mxu0 %v1747
      %1783 = vmatpush.msra.mxu0 %v1746
      %1784 = vmatpush.msra.mxu0 %v1745
      %1785 = vmatpush.msra.mxu0 %v1744
      %1786 = vmatpush.msra.mxu0 %v1743
      %1787 = vmatpush.msra.mxu0 %v1742
      %1788 = vmatpush.msra.mxu0 %v1741
      %1789 = vmatpush.msra.mxu0 %v1740
      %1790 = vmatpush.msra.mxu0 %v1739
      %1791 = vmatpush.msra.mxu0 %v1738
      %1792 = vmatpush.msra.mxu0 %v1737
      %1793 = vmatpush.msra.mxu0 %v1736
      %1794 = vmatpush.msra.mxu0 %v1735
      %1795 = vmatpush.msra.mxu0 %v1734
      %1796 = vmatpush.msra.mxu0 %v1733
      %1797 = vmatmul.f32.gmra.mxu0 %v1725
      %v1798 = vpop.f32.mrf.mxu0
      %v1799 = vadd.f32 %v1755, %v1798
      %1800 = vmatmul.f32.gmra.mxu0 %v1726
      %v1801 = vpop.f32.mrf.mxu0
      %v1802 = vadd.f32 %v1755, %v1801
      %1803 = vmatmul.f32.gmra.mxu0 %v1727
      %v1804 = vpop.f32.mrf.mxu0
      %v1805 = vadd.f32 %v1755, %v1804
      %1806 = vmatmul.f32.gmra.mxu0 %v1728
      %v1807 = vpop.f32.mrf.mxu0
      %v1808 = vadd.f32 %v1755, %v1807
      %1809 = vmatmul.f32.gmra.mxu0 %v1729
      %v1810 = vpop.f32.mrf.mxu0
      %v1811 = vadd.f32 %v1755, %v1810
      %1812 = vmatmul.f32.gmra.mxu0 %v1730
      %v1813 = vpop.f32.mrf.mxu0
      %v1814 = vadd.f32 %v1755, %v1813
      %1815 = vmatmul.f32.gmra.mxu0 %v1731
      %v1816 = vpop.f32.mrf.mxu0
      %v1817 = vadd.f32 %v1755, %v1816
      %1818 = vmatmul.f32.gmra.mxu0 %v1732
      %v1819 = vpop.f32.mrf.mxu0
      %v1820 = vadd.f32 %v1755, %v1819
      %1821 = vdwg.mxu0
      %1822 = vmatpush.msra.mxu0 0.0
      %1823 = vmatpush.msra.mxu0 0.0
      %1824 = vmatpush.msra.mxu0 0.0
      %1825 = vmatpush.msra.mxu0 0.0
      %1826 = vmatpush.msra.mxu0 0.0
      %1827 = vmatpush.msra.mxu0 0.0
      %1828 = vmatpush.msra.mxu0 0.0
      %1829 = vmatpush.msra.mxu0 0.0
      %1830 = vmatpush.msra.mxu0 0.0
      %1831 = vmatpush.msra.mxu0 0.0
      %1832 = vmatpush.msra.mxu0 0.0
      %1833 = vmatpush.msra.mxu0 0.0
      %1834 = vmatpush.msra.mxu0 %v1752
      %1835 = vmatpush.msra.mxu0 %v1751
      %1836 = vmatpush.msra.mxu0 %v1750
      %1837 = vmatpush.msra.mxu0 %v1749
      %1838 = vmatmul.f32.gmra.mxu0 %v1758
      %v1839 = vpop.f32.mrf.mxu0
      %v1840 = vadd.f32 %v1799, %v1839
      %1841 = vmatmul.f32.gmra.mxu0 %v1761
      %v1842 = vpop.f32.mrf.mxu0
      %v1843 = vadd.f32 %v1802, %v1842
      %1844 = vmatmul.f32.gmra.mxu0 %v1764
      %v1845 = vpop.f32.mrf.mxu0
      %v1846 = vadd.f32 %v1805, %v1845
      %1847 = vmatmul.f32.gmra.mxu0 %v1767
      %v1848 = vpop.f32.mrf.mxu0
      %v1849 = vadd.f32 %v1808, %v1848
      %1850 = vmatmul.f32.gmra.mxu0 %v1770
      %v1851 = vpop.f32.mrf.mxu0
      %v1852 = vadd.f32 %v1811, %v1851
      %1853 = vmatmul.f32.gmra.mxu0 %v1773
      %v1854 = vpop.f32.mrf.mxu0
      %v1855 = vadd.f32 %v1814, %v1854
      %1856 = vmatmul.f32.gmra.mxu0 %v1776
      %v1857 = vpop.f32.mrf.mxu0
      %v1858 = vadd.f32 %v1817, %v1857
      %1859 = vmatmul.f32.gmra.mxu0 %v1779
      %v1860 = vpop.f32.mrf.mxu0
      %v1861 = vadd.f32 %v1820, %v1860
      %1862 = vdwg.mxu0
      %v1863 = vmax.f32 %v1840, 0.0
      %v1864 = vmax.f32 %v1843, 0.0
      %v1865 = vmax.f32 %v1846, 0.0
      %v1866 = vmax.f32 %v1849, 0.0
      %v1867 = vmax.f32 %v1852, 0.0
      %v1868 = vmax.f32 %v1855, 0.0
      %v1869 = vmax.f32 %v1858, 0.0
      %v1870 = vmax.f32 %v1861, 0.0
      %1871 = vst.msk [vmem:[#allocation3] sm:$0x1] %vm1109, 0.0
      %1872 = vst.msk [vmem:[#allocation3 + $0x1] sm:$0xff] %vm953, %v1863
      %1873 = vst.msk [vmem:[#allocation3 + $0x9] sm:$0xff] %vm953, %v1864
      %1874 = vst.msk [vmem:[#allocation3 + $0x11] sm:$0xff] %vm953, %v1865
      %1875 = vst.msk [vmem:[#allocation3 + $0x19] sm:$0xff] %vm953, %v1866
      %1876 = vst.msk [vmem:[#allocation3 + $0x21] sm:$0xff] %vm953, %v1867
      %1877 = vst.msk [vmem:[#allocation3 + $0x29] sm:$0xff] %vm953, %v1868
      %1878 = vst.msk [vmem:[#allocation3 + $0x31] sm:$0xff] %vm953, %v1869
      %1879 = vst.msk [vmem:[#allocation3 + $0x39] sm:$0xff] %vm953, %v1870
      %1880 = vst.msk [vmem:[#allocation3 + $0x41] sm:$0x7f] %vm1119, 0.0
      %v1881 = vld [vmem:[#allocation3] ss:$4 sm:$0xff]
      %v1882 = vld [vmem:[%s1122] ss:$4 sm:$0xff]
      %v1883 = vld [vmem:[%s1124] ss:$4 sm:$0xff]
      %v1884 = vld [vmem:[%s1126] ss:$4 sm:$0xff]
      %v1885 = vld [vmem:[%s1128] ss:$4 sm:$0xff]
      %v1886 = vld [vmem:[%s1130] ss:$4 sm:$0xff]
      %1889 = vrot.lane.b32.xlu0 %v1883, 64
      %v1890 = vpop.permute.xlu0 %1889
      %1891 = vrot.lane.b32.xlu0 %v1884, 64
      %v1892 = vpop.permute.xlu0 %1891
      %v1895 = vsel %vm953, %v1881, %v1890
      %v1896 = vsel %vm953, %v1882, %v1892
      %v1897 = vld [vmem:[%s6] sm:$0xff]
      %v1898 = vld [vmem:[%s6 + $0x8] sm:$0xff]
      %v1899 = vld [vmem:[%s6 + $0x10] sm:$0xff]
      %v1900 = vld [vmem:[%s6 + $0x18] sm:$0xff]
      %v1901 = vld [vmem:[%s6 + $0x20] sm:$0xff]
      %v1902 = vld [vmem:[%s6 + $0x28] sm:$0xff]
      %v1903 = vld [vmem:[%s6 + $0x30] sm:$0xff]
      %v1904 = vld [vmem:[%s6 + $0x38] sm:$0xff]
      %v1905 = vld [vmem:[%s6 + $0x40] sm:$0xff]
      %v1906 = vld [vmem:[%s6 + $0x48] sm:$0xff]
      %v1907 = vld [vmem:[%s6 + $0x50] sm:$0xff]
      %v1908 = vld [vmem:[%s6 + $0x58] sm:$0xff]
      %v1909 = vld [vmem:[%s6 + $0x60] sm:$0xff]
      %v1910 = vld [vmem:[%s6 + $0x68] sm:$0xff]
      %v1911 = vld [vmem:[%s6 + $0x70] sm:$0xff]
      %v1912 = vld [vmem:[%s6 + $0x78] sm:$0xff]
      %v1913 = vld [vmem:[%s6 + $0x80] sm:$0xff]
      %v1914 = vld [vmem:[%s6 + $0x88] sm:$0xff]
      %v1915 = vld [vmem:[%s6 + $0x90] sm:$0xff]
      %v1916 = vld [vmem:[%s6 + $0x98] sm:$0xff]
      %v1917 = vld [vmem:[%s6 + $0xa0] sm:$0xff]
      %v1918 = vld [vmem:[%s6 + $0xa8] sm:$0xff]
      %v1919 = vld [vmem:[%s6 + $0xb0] sm:$0xff]
      %v1920 = vld [vmem:[%s6 + $0xb8] sm:$0xff]
      %v1921 = vld [vmem:[%s7] sm:$0x1]
      %v1923 = vperm.slane %v1921, 0
      %v1926 = vsel %vm953, %v1885, 0
      %v1929 = vsel %vm953, %v1886, 0
      %1931 = vmatpush.msra.mxu0 %v1912
      %1932 = vmatpush.msra.mxu0 %v1911
      %1933 = vmatpush.msra.mxu0 %v1910
      %1934 = vmatpush.msra.mxu0 %v1909
      %1935 = vmatpush.msra.mxu0 %v1908
      %1936 = vmatpush.msra.mxu0 %v1907
      %1937 = vmatpush.msra.mxu0 %v1906
      %1938 = vmatpush.msra.mxu0 %v1905
      %1939 = vmatpush.msra.mxu0 %v1904
      %1940 = vmatpush.msra.mxu0 %v1903
      %1941 = vmatpush.msra.mxu0 %v1902
      %1942 = vmatpush.msra.mxu0 %v1901
      %1943 = vmatpush.msra.mxu0 %v1900
      %1944 = vmatpush.msra.mxu0 %v1899
      %1945 = vmatpush.msra.mxu0 %v1898
      %1946 = vmatpush.msra.mxu0 %v1897
      %1947 = vmatmul.f32.gmra.mxu0 %v1895
      %v1948 = vpop.f32.mrf.mxu0
      %v1949 = vadd.f32 %v1923, %v1948
      %1950 = vmatmul.f32.gmra.mxu0 %v1896
      %v1951 = vpop.f32.mrf.mxu0
      %v1952 = vadd.f32 %v1923, %v1951
      %1953 = vdwg.mxu0
      %1954 = vmatpush.msra.mxu0 0.0
      %1955 = vmatpush.msra.mxu0 0.0
      %1956 = vmatpush.msra.mxu0 0.0
      %1957 = vmatpush.msra.mxu0 0.0
      %1958 = vmatpush.msra.mxu0 0.0
      %1959 = vmatpush.msra.mxu0 0.0
      %1960 = vmatpush.msra.mxu0 0.0
      %1961 = vmatpush.msra.mxu0 0.0
      %1962 = vmatpush.msra.mxu0 %v1920
      %1963 = vmatpush.msra.mxu0 %v1919
      %1964 = vmatpush.msra.mxu0 %v1918
      %1965 = vmatpush.msra.mxu0 %v1917
      %1966 = vmatpush.msra.mxu0 %v1916
      %1967 = vmatpush.msra.mxu0 %v1915
      %1968 = vmatpush.msra.mxu0 %v1914
      %1969 = vmatpush.msra.mxu0 %v1913
      %1970 = vmatmul.f32.gmra.mxu0 %v1926
      %v1971 = vpop.f32.mrf.mxu0
      %v1972 = vadd.f32 %v1949, %v1971
      %1973 = vmatmul.f32.gmra.mxu0 %v1929
      %v1974 = vpop.f32.mrf.mxu0
      %v1975 = vadd.f32 %v1952, %v1974
      %1976 = vdwg.mxu0
      %v1977 = vmax.f32 %v1972, 0.0
      %v1978 = vmax.f32 %v1975, 0.0
      %v1979 = vld [vmem:[%s8] sm:$0xff]
      %v1980 = vld [vmem:[%s8 + $0x8] sm:$0xff]
      %v1981 = vld [vmem:[%s8 + $0x10] sm:$0xff]
      %v1982 = vld [vmem:[%s8 + $0x18] sm:$0xff]
      %v1983 = vld [vmem:[%s8 + $0x20] sm:$0xff]
      %v1984 = vld [vmem:[%s8 + $0x28] sm:$0xff]
      %v1985 = vld [vmem:[%s8 + $0x30] sm:$0xff]
      %v1986 = vld [vmem:[%s8 + $0x38] sm:$0xff]
      %v1987 = vld [vmem:[%s8 + $0x40] sm:$0xff]
      %v1988 = vld [vmem:[%s8 + $0x48] sm:$0xff]
      %v1989 = vld [vmem:[%s9] sm:$0x1]
      %v1991 = vperm.slane %v1989, 0
      %vm1993 = vcmask 654336
      %v1995 = vsel %vm1993, %v1977, 0
      %v1998 = vsel %vm1993, %v1978, 0
      %2000 = vmatpush.msra.mxu0 0.0
      %2001 = vmatpush.msra.mxu0 0.0
      %2002 = vmatpush.msra.mxu0 0.0
      %2003 = vmatpush.msra.mxu0 0.0
      %2004 = vmatpush.msra.mxu0 0.0
      %2005 = vmatpush.msra.mxu0 0.0
      %2006 = vmatpush.msra.mxu0 %v1988
      %2007 = vmatpush.msra.mxu0 %v1987
      %2008 = vmatpush.msra.mxu0 %v1986
      %2009 = vmatpush.msra.mxu0 %v1985
      %2010 = vmatpush.msra.mxu0 %v1984
      %2011 = vmatpush.msra.mxu0 %v1983
      %2012 = vmatpush.msra.mxu0 %v1982
      %2013 = vmatpush.msra.mxu0 %v1981
      %2014 = vmatpush.msra.mxu0 %v1980
      %2015 = vmatpush.msra.mxu0 %v1979
      %2016 = vmatmul.f32.gmra.mxu0 %v1995
      %v2017 = vpop.f32.mrf.mxu0
      %v2018 = vadd.f32 %v1991, %v2017
      %2019 = vmatmul.f32.gmra.mxu0 %v1998
      %v2020 = vpop.f32.mrf.mxu0
      %v2021 = vadd.f32 %v1991, %v2020
      %2022 = vdwg.mxu0
      %2023 = vst [vmem:[%s412] sm:$0xff] %v2018
      %2024 = vst [vmem:[%s412 + $0x8] sm:$0xff] %v2021
      %v2025 = vmul.f32 %v1222, %v1222
      %v2026 = vmul.f32 %v1223, %v1223
      %v2027 = vsel %vm1993, %v2025, 0.0
      %2028 = vadd.xlane.f32.xlu0 %v2027
      %v2029 = vpop.xlane.xlu0 %2028
      %v2030 = vsel %vm1993, %v2026, 0.0
      %2031 = vadd.xlane.f32.xlu0 %v2030
      %v2032 = vpop.xlane.xlu0 %2031
      %v2033 = vmax.f32 %v2029, 1e-24
      %v2034 = vmax.f32 %v2032, 1e-24
      %v2035 = vrsqrt.pop %v2033
      %v2036 = vmul.f32 %v2035, %v2033
      %v2037 = vmul.f32 %v2036, %v2035
      %v2038 = vmul.f32 0.5, %v2037
      %v2039 = vsub.f32 1.5, %v2038
      %v2040 = vmul.f32 %v2035, %v2039
      %vm2041 = vweird.f32 %v2033
      %vm2042 = vweird.f32 %v2035
      %vm2043 = vmor %vm2041, %vm2042
      %v2044 = vsel %vm2043, %v2035, %v2040
      %v2045 = vrsqrt.pop %v2034
      %v2046 = vmul.f32 %v2045, %v2034
      %v2047 = vmul.f32 %v2046, %v2045
      %v2048 = vmul.f32 0.5, %v2047
      %v2049 = vsub.f32 1.5, %v2048
      %v2050 = vmul.f32 %v2045, %v2049
      %vm2051 = vweird.f32 %v2034
      %vm2052 = vweird.f32 %v2045
      %vm2053 = vmor %vm2051, %vm2052
      %v2054 = vsel %vm2053, %v2045, %v2050
      %v2055 = vmul.f32 %v1222, %v2044
      %v2056 = vmul.f32 %v1223, %v2054
      %v2057 = vmul.f32 %v1977, %v1977
      %v2058 = vmul.f32 %v1978, %v1978
      %v2059 = vsel %vm1993, %v2057, 0.0
      %2060 = vadd.xlane.f32.xlu0 %v2059
      %v2061 = vpop.xlane.xlu0 %2060
      %v2062 = vsel %vm1993, %v2058, 0.0
      %2063 = vadd.xlane.f32.xlu0 %v2062
      %v2064 = vpop.xlane.xlu0 %2063
      %v2065 = vmax.f32 %v2061, 1e-24
      %v2066 = vmax.f32 %v2064, 1e-24
      %v2067 = vrsqrt.pop %v2065
      %v2068 = vmul.f32 %v2067, %v2065
      %v2069 = vmul.f32 %v2068, %v2067
      %v2070 = vmul.f32 0.5, %v2069
      %v2071 = vsub.f32 1.5, %v2070
      %v2072 = vmul.f32 %v2067, %v2071
      %vm2073 = vweird.f32 %v2065
      %vm2074 = vweird.f32 %v2067
      %vm2075 = vmor %vm2073, %vm2074
      %v2076 = vsel %vm2075, %v2067, %v2072
      %v2077 = vrsqrt.pop %v2066
      %v2078 = vmul.f32 %v2077, %v2066
      %v2079 = vmul.f32 %v2078, %v2077
      %v2080 = vmul.f32 0.5, %v2079
      %v2081 = vsub.f32 1.5, %v2080
      %v2082 = vmul.f32 %v2077, %v2081
      %vm2083 = vweird.f32 %v2066
      %vm2084 = vweird.f32 %v2077
      %vm2085 = vmor %vm2083, %vm2084
      %v2086 = vsel %vm2085, %v2077, %v2082
      %v2087 = vmul.f32 %v1977, %v2076
      %v2088 = vmul.f32 %v1978, %v2086
      %v2090 = vsel %vm1993, %v2055, 0
      %v2093 = vsel %vm1993, %v2056, 0
      %v2096 = vsel %vm1993, %v2087, 0
      %v2099 = vsel %vm1993, %v2088, 0
      %2101 = vmatpush.xpose.msra.mxu0 0.0
      %2102 = vmatpush.xpose.msra.mxu0 0.0
      %2103 = vmatpush.xpose.msra.mxu0 0.0
      %2104 = vmatpush.xpose.msra.mxu0 0.0
      %2105 = vmatpush.xpose.msra.mxu0 0.0
      %2106 = vmatpush.xpose.msra.mxu0 0.0
      %2107 = vmatpush.xpose.msra.mxu0 0.0
      %2108 = vmatpush.xpose.msra.mxu0 0.0
      %2109 = vmatpush.xpose.msra.mxu0 0.0
      %2110 = vmatpush.xpose.msra.mxu0 0.0
      %2111 = vmatpush.xpose.msra.mxu0 0.0
      %2112 = vmatpush.xpose.msra.mxu0 0.0
      %2113 = vmatpush.xpose.msra.mxu0 0.0
      %2114 = vmatpush.xpose.msra.mxu0 0.0
      %2115 = vmatpush.xpose.msra.mxu0 %v2099
      %2116 = vmatpush.xpose.msra.mxu0 %v2096
      %2117 = vmatmul.f32.gmra.mxu0 %v2090
      %v2118 = vpop.f32.mrf.mxu0
      %v2119 = vadd.f32 0.0, %v2118
      %2120 = vmatmul.f32.gmra.mxu0 %v2093
      %v2121 = vpop.f32.mrf.mxu0
      %v2122 = vadd.f32 0.0, %v2121
      %2123 = vdwg.mxu0
      %v2124 = vsub.f32 1.0, %v2119
      %v2125 = vsub.f32 1.0, %v2122
      %v2126 = vmul.f32 %v2124, -0.1
      %v2127 = vmul.f32 %v2125, -0.1
      %v2128 = vmul.f32 %v2126, 1.442695
      %v2129 = vpow.pop %v2128
      %v2130 = vmul.f32 %v2127, 1.442695
      %v2131 = vpow.pop %v2130
      %vm2132 = vcmask 130048
      %v2133 = vsel %vm2132, %v2129, 0.0
      %2134 = vadd.xlane.f32.xlu0 %v2133
      %v2135 = vpop.xlane.xlu0 %2134
      %v2136 = vsel %vm2132, %v2131, 0.0
      %2137 = vadd.xlane.f32.xlu0 %v2136
      %v2138 = vpop.xlane.xlu0 %2137
      %v2139 = vrcp.pop %v2135
      %v2140 = vmul.f32 %v2135, %v2139
      %v2141 = vsub.f32 1.0, %v2140
      %v2142 = vmul.f32 %v2139, %v2141
      %v2143 = vadd.f32 %v2139, %v2142
      %vm2144 = vweird.f32 %v2135
      %vm2145 = vweird.f32 %v2139
      %vm2146 = vmor %vm2144, %vm2145
      %v2147 = vsel %vm2146, %v2139, %v2143
      %v2148 = vand.u32 2147483647, %v2135
      %vm2149 = vcmp.eq.f32.partialorder %v2148, 8.507059e+37
      %v2150 = vand.u32 %v2135, 2147483648
      %v2151 = vor.u32 1.1754944e-38, %v2150
      %v2152 = vsel %vm2149, %v2151, %v2147
      %v2153 = vmul.f32 1.0, %v2152
      %v2154 = vrcp.pop %v2138
      %v2155 = vmul.f32 %v2138, %v2154
      %v2156 = vsub.f32 1.0, %v2155
      %v2157 = vmul.f32 %v2154, %v2156
      %v2158 = vadd.f32 %v2154, %v2157
      %vm2159 = vweird.f32 %v2138
      %vm2160 = vweird.f32 %v2154
      %vm2161 = vmor %vm2159, %vm2160
      %v2162 = vsel %vm2161, %v2154, %v2158
      %v2163 = vand.u32 2147483647, %v2138
      %vm2164 = vcmp.eq.f32.partialorder %v2163, 8.507059e+37
      %v2165 = vand.u32 %v2138, 2147483648
      %v2166 = vor.u32 1.1754944e-38, %v2165
      %v2167 = vsel %vm2164, %v2166, %v2162
      %v2168 = vmul.f32 1.0, %v2167
      %v2169 = vmul.f32 %v2129, %v2153
      %v2170 = vmul.f32 %v2131, %v2168
      %v2171 = vsel %vm2132, %v2169, 0.0
      %v2172 = vsel %vm2132, %v2170, 0.0
      %v2173 = vadd.f32 %v2171, %v2172
      %v2174 = vrot.slane %v2173, 4
      %v2175 = vadd.f32 %v2173, %v2174
      %v2176 = vrot.slane %v2175, 2
      %v2177 = vadd.f32 %v2175, %v2176
      %v2178 = vrot.slane %v2177, 1
      %v2179 = vadd.f32 %v2177, %v2178
      %v2180 = vrcp.pop %v2179
      %v2181 = vmul.f32 %v2179, %v2180
      %v2182 = vsub.f32 1.0, %v2181
      %v2183 = vmul.f32 %v2180, %v2182
      %v2184 = vadd.f32 %v2180, %v2183
      %vm2185 = vweird.f32 %v2179
      %vm2186 = vweird.f32 %v2180
      %vm2187 = vmor %vm2185, %vm2186
      %v2188 = vsel %vm2187, %v2180, %v2184
      %v2189 = vand.u32 2147483647, %v2179
      %vm2190 = vcmp.eq.f32.partialorder %v2189, 8.507059e+37
      %v2191 = vand.u32 %v2179, 2147483648
      %v2192 = vor.u32 1.1754944e-38, %v2191
      %v2193 = vsel %vm2190, %v2192, %v2188
      %v2194 = vmul.f32 1.0, %v2193
      %v2195 = vmul.f32 %v2129, %v2194
      %v2196 = vmul.f32 %v2131, %v2194
      %v2197 = vsel %vm2132, %v2195, 0.0
      %2198 = vadd.xlane.f32.xlu0 %v2197
      %v2199 = vpop.xlane.xlu0 %2198
      %v2200 = vsel %vm2132, %v2196, 0.0
      %2201 = vadd.xlane.f32.xlu0 %v2200
      %v2202 = vpop.xlane.xlu0 %2201
      %v2203 = vrcp.pop %v2199
      %v2204 = vmul.f32 %v2199, %v2203
      %v2205 = vsub.f32 1.0, %v2204
      %v2206 = vmul.f32 %v2203, %v2205
      %v2207 = vadd.f32 %v2203, %v2206
      %vm2208 = vweird.f32 %v2199
      %vm2209 = vweird.f32 %v2203
      %vm2210 = vmor %vm2208, %vm2209
      %v2211 = vsel %vm2210, %v2203, %v2207
      %v2212 = vand.u32 2147483647, %v2199
      %vm2213 = vcmp.eq.f32.partialorder %v2212, 8.507059e+37
      %v2214 = vand.u32 %v2199, 2147483648
      %v2215 = vor.u32 1.1754944e-38, %v2214
      %v2216 = vsel %vm2213, %v2215, %v2211
      %v2217 = vmul.f32 1.0, %v2216
      %v2218 = vrcp.pop %v2202
      %v2219 = vmul.f32 %v2202, %v2218
      %v2220 = vsub.f32 1.0, %v2219
      %v2221 = vmul.f32 %v2218, %v2220
      %v2222 = vadd.f32 %v2218, %v2221
      %vm2223 = vweird.f32 %v2202
      %vm2224 = vweird.f32 %v2218
      %vm2225 = vmor %vm2223, %vm2224
      %v2226 = vsel %vm2225, %v2218, %v2222
      %v2227 = vand.u32 2147483647, %v2202
      %vm2228 = vcmp.eq.f32.partialorder %v2227, 8.507059e+37
      %v2229 = vand.u32 %v2202, 2147483648
      %v2230 = vor.u32 1.1754944e-38, %v2229
      %v2231 = vsel %vm2228, %v2230, %v2226
      %v2232 = vmul.f32 1.0, %v2231
      %v2233 = vmul.f32 %v2129, %v2217
      %v2234 = vmul.f32 %v2131, %v2232
      %v2235 = vsel %vm2132, %v2233, 0.0
      %v2236 = vsel %vm2132, %v2234, 0.0
      %v2237 = vadd.f32 %v2235, %v2236
      %v2238 = vrot.slane %v2237, 4
      %v2239 = vadd.f32 %v2237, %v2238
      %v2240 = vrot.slane %v2239, 2
      %v2241 = vadd.f32 %v2239, %v2240
      %v2242 = vrot.slane %v2241, 1
      %v2243 = vadd.f32 %v2241, %v2242
      %v2244 = vrcp.pop %v2243
      %v2245 = vmul.f32 %v2243, %v2244
      %v2246 = vsub.f32 1.0, %v2245
      %v2247 = vmul.f32 %v2244, %v2246
      %v2248 = vadd.f32 %v2244, %v2247
      %vm2249 = vweird.f32 %v2243
      %vm2250 = vweird.f32 %v2244
      %vm2251 = vmor %vm2249, %vm2250
      %v2252 = vsel %vm2251, %v2244, %v2248
      %v2253 = vand.u32 2147483647, %v2243
      %vm2254 = vcmp.eq.f32.partialorder %v2253, 8.507059e+37
      %v2255 = vand.u32 %v2243, 2147483648
      %v2256 = vor.u32 1.1754944e-38, %v2255
      %v2257 = vsel %vm2254, %v2256, %v2252
      %v2258 = vmul.f32 1.0, %v2257
      %v2259 = vmul.f32 %v2129, %v2258
      %v2260 = vmul.f32 %v2131, %v2258
      %v2261 = vsel %vm2132, %v2259, 0.0
      %2262 = vadd.xlane.f32.xlu0 %v2261
      %v2263 = vpop.xlane.xlu0 %2262
      %v2264 = vsel %vm2132, %v2260, 0.0
      %2265 = vadd.xlane.f32.xlu0 %v2264
      %v2266 = vpop.xlane.xlu0 %2265
      %v2267 = vrcp.pop %v2263
      %v2268 = vmul.f32 %v2263, %v2267
      %v2269 = vsub.f32 1.0, %v2268
      %v2270 = vmul.f32 %v2267, %v2269
      %v2271 = vadd.f32 %v2267, %v2270
      %vm2272 = vweird.f32 %v2263
      %vm2273 = vweird.f32 %v2267
      %vm2274 = vmor %vm2272, %vm2273
      %v2275 = vsel %vm2274, %v2267, %v2271
      %v2276 = vand.u32 2147483647, %v2263
      %vm2277 = vcmp.eq.f32.partialorder %v2276, 8.507059e+37
      %v2278 = vand.u32 %v2263, 2147483648
      %v2279 = vor.u32 1.1754944e-38, %v2278
      %v2280 = vsel %vm2277, %v2279, %v2275
      %v2281 = vmul.f32 1.0, %v2280
      %v2282 = vrcp.pop %v2266
      %v2283 = vmul.f32 %v2266, %v2282
      %v2284 = vsub.f32 1.0, %v2283
      %v2285 = vmul.f32 %v2282, %v2284
      %v2286 = vadd.f32 %v2282, %v2285
      %vm2287 = vweird.f32 %v2266
      %vm2288 = vweird.f32 %v2282
      %vm2289 = vmor %vm2287, %vm2288
      %v2290 = vsel %vm2289, %v2282, %v2286
      %v2291 = vand.u32 2147483647, %v2266
      %vm2292 = vcmp.eq.f32.partialorder %v2291, 8.507059e+37
      %v2293 = vand.u32 %v2266, 2147483648
      %v2294 = vor.u32 1.1754944e-38, %v2293
      %v2295 = vsel %vm2292, %v2294, %v2290
      %v2296 = vmul.f32 1.0, %v2295
      %v2297 = vmul.f32 %v2129, %v2281
      %v2298 = vmul.f32 %v2131, %v2296
      %v2299 = vsel %vm2132, %v2297, 0.0
      %v2300 = vsel %vm2132, %v2298, 0.0
      %v2301 = vadd.f32 %v2299, %v2300
      %v2302 = vrot.slane %v2301, 4
      %v2303 = vadd.f32 %v2301, %v2302
      %v2304 = vrot.slane %v2303, 2
      %v2305 = vadd.f32 %v2303, %v2304
      %v2306 = vrot.slane %v2305, 1
      %v2307 = vadd.f32 %v2305, %v2306
      %v2308 = vrcp.pop %v2307
      %v2309 = vmul.f32 %v2307, %v2308
      %v2310 = vsub.f32 1.0, %v2309
      %v2311 = vmul.f32 %v2308, %v2310
      %v2312 = vadd.f32 %v2308, %v2311
      %vm2313 = vweird.f32 %v2307
      %vm2314 = vweird.f32 %v2308
      %vm2315 = vmor %vm2313, %vm2314
      %v2316 = vsel %vm2315, %v2308, %v2312
      %v2317 = vand.u32 2147483647, %v2307
      %vm2318 = vcmp.eq.f32.partialorder %v2317, 8.507059e+37
      %v2319 = vand.u32 %v2307, 2147483648
      %v2320 = vor.u32 1.1754944e-38, %v2319
      %v2321 = vsel %vm2318, %v2320, %v2316
      %v2322 = vmul.f32 1.0, %v2321
      %v2324 = vsel %vm2132, %v2129, 0
      %v2327 = vsel %vm2132, %v2131, 0
      %2329 = vmatpush.msra.mxu0 0.0
      %2330 = vmatpush.msra.mxu0 0.0
      %2331 = vmatpush.msra.mxu0 0.0
      %2332 = vmatpush.msra.mxu0 0.0
      %2333 = vmatpush.msra.mxu0 0.0
      %2334 = vmatpush.msra.mxu0 0.0
      %2335 = vmatpush.msra.mxu0 0.0
      %2336 = vmatpush.msra.mxu0 0.0
      %2337 = vmatpush.msra.mxu0 0.0
      %2338 = vmatpush.msra.mxu0 0.0
      %2339 = vmatpush.msra.mxu0 0.0
      %2340 = vmatpush.msra.mxu0 0.0
      %2341 = vmatpush.msra.mxu0 0.0
      %2342 = vmatpush.msra.mxu0 0.0
      %2343 = vmatpush.msra.mxu0 %v2296
      %2344 = vmatpush.msra.mxu0 %v2281
      %2345 = vmatmul.f32.gmra.mxu0 %v2324
      %v2346 = vpop.f32.mrf.mxu0
      %v2347 = vadd.f32 0.0, %v2346
      %2348 = vmatmul.f32.gmra.mxu0 %v2327
      %v2349 = vpop.f32.mrf.mxu0
      %v2350 = vadd.f32 0.0, %v2349
      %2351 = vdwg.mxu0
      %2353 = vset.pattern.permute.xlu0 0
      %2354 = vperm.xlu0 %2353, %v2347
      %v2355 = vpop.permute.xlu0 %2354
      %2358 = vset.pattern.permute.xlu0 0
      %2359 = vperm.xlu0 %2358, %v2350
      %v2360 = vpop.permute.xlu0 %2359
      %v2362 = vmul.f32 %v2355, %v2322
      %v2363 = vmul.f32 %v2360, %v2322
      %v2364 = vmul.f32 %v2362, %v2124
      %v2365 = vmul.f32 %v2363, %v2125
      %v2366 = vsel %vm2132, %v2364, 0.0
      %v2367 = vsel %vm2132, %v2365, 0.0
      %v2368 = vadd.f32 %v2366, %v2367
      %2369 = vadd.xlane.f32.xlu0 %v2368
      %v2370 = vpop.xlane.xlu0 %2369
      %v2371 = vrot.slane %v2370, 4
      %v2372 = vadd.f32 %v2370, %v2371
      %v2373 = vrot.slane %v2372, 2
      %v2374 = vadd.f32 %v2372, %v2373
      %v2375 = vrot.slane %v2374, 1
      %v2376 = vadd.f32 %v2374, %v2375
      %s2377 = vtos %v2376
      %v2378 = vadd.f32 %v2362, 1e-09
      %v2379 = vadd.f32 %v2363, 1e-09
      %v2380 = vlog2.pop %v2378
      %v2381 = vmul.f32 %v2380, 0.6931472
      %v2382 = vlog2.pop %v2379
      %v2383 = vmul.f32 %v2382, 0.6931472
      %v2384 = vmul.f32 %v2362, %v2381
      %v2385 = vmul.f32 %v2363, %v2383
      %v2386 = vsel %vm2132, %v2384, 0.0
      %v2387 = vsel %vm2132, %v2385, 0.0
      %v2388 = vadd.f32 %v2386, %v2387
      %2389 = vadd.xlane.f32.xlu0 %v2388
      %v2390 = vpop.xlane.xlu0 %2389
      %v2391 = vrot.slane %v2390, 4
      %v2392 = vadd.f32 %v2390, %v2391
      %v2393 = vrot.slane %v2392, 2
      %v2394 = vadd.f32 %v2392, %v2393
      %v2395 = vrot.slane %v2394, 1
      %v2396 = vadd.f32 %v2394, %v2395
      %s2397 = vtos %v2396
      %s2398 = ssub.f32 %s2377, %s2397
      %v2399 = vstv %s2398
      %2400 = vst [vmem:[%s415] sm:$0x1] %v2399
      %p2401 = scmp.lt.s32.totalorder %s23, 1
      %s2402 = scalar_select %p2401, %s23, 1
      %s2403 = smul.addr %s2402, 2
      %s2404 = smul.addr %s2403, 8
      %s2405 = scalar_lea.vmem %s10, %s2404
      %p2406 = scmp.lt.s32.totalorder %s23, 1
      %s2407 = scalar_select %p2406, %s23, 1
      %s2408 = scalar_lea.vmem %s11, %s2407
      // Predicated region
      $region61: #{sekws_forward.1} parent=59 // pred_check
        %p2409 = pneg %p261
      $region62: #{sekws_forward.1} parent=59 // pred_check_branch
        %2411 = sbr.rel (%p2409) target = $region64
      $region63: #{sekws_forward.1} parent=59 // pred_region
        _
      $region64: #{sekws_forward.1} parent=59 // pred_fallthru
        _
      // Predicated region
      $region65: #{sekws_forward.1} parent=59 // pred_check
        %p2412 = pneg %p287
      $region66: #{sekws_forward.1} parent=59 // pred_check_branch
        %2414 = sbr.rel (%p2412) target = $region68
      $region67: #{sekws_forward.1} parent=59 // pred_region
        _
      $region68: #{sekws_forward.1} parent=59 // pred_fallthru
        _
    $region60: #{sekws_forward.1} parent=5 // pred_fallthru
      _
    %p2415 = scmp.le.s32.totalorder 2, %s18
    // Predicated region
    $region69: #{sekws_forward.1} parent=5 // pred_check
      %p2416 = pneg %p2415
    $region70: #{sekws_forward.1} parent=5 // pred_check_branch
      %2418 = sbr.rel (%p2416) target = $region72
    $region71: #{sekws_forward.1} parent=5 // pred_region
      %s2419 = ssub.s32 %s18, 2
      // Predicated region
      $region73: #{sekws_forward.1} parent=71 // pred_check
        %p2420 = pneg %p267
      $region74: #{sekws_forward.1} parent=71 // pred_check_branch
        %2422 = sbr.rel (%p2420) target = $region76
      $region75: #{sekws_forward.1} parent=71 // pred_region
        %p2423 = scmp.lt.s32.totalorder %s24, 1
        %s2424 = scalar_select %p2423, %s24, 1
        %s2425 = smul.addr %s2424, 2
        %s2426 = smul.addr %s2425, 8
        %s2427 = scalar_lea.vmem %s10, %s2426
      $region76: #{sekws_forward.1} parent=71 // pred_fallthru
        _
      // Predicated region
      $region77: #{sekws_forward.1} parent=71 // pred_check
        %p2428 = pneg %p293
      $region78: #{sekws_forward.1} parent=71 // pred_check_branch
        %2430 = sbr.rel (%p2428) target = $region80
      $region79: #{sekws_forward.1} parent=71 // pred_region
        %p2431 = scmp.lt.s32.totalorder %s24, 1
        %s2432 = scalar_select %p2431, %s24, 1
        %s2433 = scalar_lea.vmem %s11, %s2432
      $region80: #{sekws_forward.1} parent=71 // pred_fallthru
        _
    $region72: #{sekws_forward.1} parent=5 // pred_fallthru
      _
  $region6: #{sekws_forward.1} parent=0 // loop_footer
    %s22 = sadd.s32 1, %s18
  $region7: #{sekws_forward.1} parent=0 // loop_footer_branch
    %17 = sbr.rel target = $region3
  $region8: #{sekws_forward.1} parent=0 // loop_exit
    _

</llo_original>
